<compile_context>
chip_gen: v7x
topology: tpu7x:2x2x1
jax: 0.10.0
libtpu: 0.0.40
codegen_flags: <defaults>
</compile_context>

<pallas_src>
import jax
import jax.numpy as jnp
from jax.experimental import pallas as pl
from jax.experimental.pallas import tpu as pltpu


def _round_up(x, m):
    return ((x + m - 1) // m) * m


def _round_down(x, m):
    return max(m, (x // m) * m)


def _choose_tiling(B, C, HW, itemsize, budget_bytes):
    """Pick (batch block Bb, spatial tile t) from a VMEM budget.

    Per grid step the pipelined buffers hold ~ 2 (double buffer) * (x tile +
    out tile) = 4 * Bb * C * t * itemsize bytes.
    """
    per_lane = 4 * C * itemsize            # x + out, double-buffered, per lane
    full_bytes = per_lane * HW
    if full_bytes <= budget_bytes:
        # Whole spatial extent fits comfortably: block over batch instead.
        t = HW
        Bb = int(max(1, min(B, budget_bytes // max(1, full_bytes), 8)))
    else:
        Bb = 1
        t = _round_down(budget_bytes // per_lane, 128)
        t = min(t, _round_up(HW, 128))
    # v7x has 2 TensorCores: make sure there are >= 2 parallel grid steps
    # whenever feasible (harmless on v5e/v6e).
    if pl.cdiv(B, Bb) * pl.cdiv(HW, t) < 2:
        if B >= 2:
            Bb = (B + 1) // 2
        elif t == HW and HW >= 256:
            t = _round_up(pl.cdiv(HW, 2), 128)
    return Bb, t


def _make_mask_kernel(Bb, fuse_multiply, precision):
    def kernel(x_ref, w1_ref, w2_ref, o_ref):
        # x_ref/o_ref: (Bb, C, t);  w1_ref: (hidden, C);  w2_ref: (C, hidden)
        w1 = w1_ref[...]
        w2 = w2_ref[...]
        for i in range(Bb):                       # static unroll (Bb <= 8)
            xi = x_ref[i]                         # (C, t)
            h = jnp.dot(w1, xi, preferred_element_type=jnp.float32,
                        precision=precision)      # (hidden, t)
            h = jnp.maximum(h, 0.0).astype(w2.dtype)          # ReLU
            y = jnp.dot(w2, h, preferred_element_type=jnp.float32,
                        precision=precision)      # (C, t)
            # sigmoid(y) == 0.5*tanh(0.5*y) + 0.5 : one EUP push, no exact divide.
            m = 0.5 * jnp.tanh(0.5 * y) + 0.5
            if fuse_multiply:
                m = m * xi.astype(m.dtype)
            o_ref[i] = m.astype(o_ref.dtype)
    return kernel


def mask_forward(x_nchw, w1, w2, *, fuse_input_multiply=False,
                 vmem_budget_bytes=12 << 20):
    """Channel-attention mask (PyTorch `Mask.forward`).

    x_nchw: (B, C, H, W), f32 or bf16 (NCHW, like the PyTorch module).
    w1:     (C//r, C)  == Conv2d(dim, dim//r, 1, bias=False).weight[:, :, 0, 0]
    w2:     (C, C//r)  == Conv2d(dim//r, dim, 1, bias=False).weight[:, :, 0, 0]
    Returns the mask (B, C, H, W); if fuse_input_multiply, returns x * mask.
    """
    B, C, H, W = x_nchw.shape
    hidden = w1.shape[0]
    assert w1.shape == (hidden, C) and w2.shape == (C, hidden)

    dtype = x_nchw.dtype
    w1 = w1.astype(dtype)
    w2 = w2.astype(dtype)
    itemsize = jnp.dtype(dtype).itemsize

    HW = H * W
    x3 = x_nchw.reshape(B, C, HW)          # free reshape of contiguous NCHW

    Bb, t = _choose_tiling(B, C, HW, itemsize, vmem_budget_bytes)
    n_b = pl.cdiv(B, Bb)
    n_s = pl.cdiv(HW, t)

    precision = (jax.lax.Precision.HIGHEST
                 if jnp.dtype(dtype) == jnp.dtype(jnp.float32) else None)

    # Pipelined VMEM estimate (x + out double-buffered, plus weights).
    est_bytes = 4 * Bb * C * t * itemsize + 4 * hidden * C * itemsize
    compiler_kwargs = dict(dimension_semantics=("parallel", "parallel"))
    if est_bytes > (14 << 20):
        # Above the v5e scoped default; give the compiler explicit headroom.
        compiler_kwargs["vmem_limit_bytes"] = int(est_bytes + (4 << 20))

    cost = pl.CostEstimate(
        flops=4 * B * hidden * C * HW,               # two matmuls
        transcendentals=B * C * HW,                  # one tanh per output elem
        bytes_accessed=2 * B * C * HW * itemsize + 2 * hidden * C * itemsize,
    )

    out = pl.pallas_call(
        _make_mask_kernel(Bb, fuse_input_multiply, precision),
        out_shape=jax.ShapeDtypeStruct((B, C, HW), dtype),
        grid_spec=pltpu.PrefetchScalarGridSpec(
            num_scalar_prefetch=0,
            grid=(n_b, n_s),
            in_specs=[
                pl.BlockSpec((Bb, C, t), lambda b, s: (b, 0, s)),   # x tile
                pl.BlockSpec((hidden, C), lambda b, s: (0, 0)),     # w1 (VMEM-resident)
                pl.BlockSpec((C, hidden), lambda b, s: (0, 0)),     # w2 (VMEM-resident)
            ],
            out_specs=pl.BlockSpec((Bb, C, t), lambda b, s: (b, 0, s)),
        ),
        compiler_params=pltpu.CompilerParams(**compiler_kwargs),
        cost_estimate=cost,
    )(x3, w1, w2)

    return out.reshape(B, C, H, W)


def reference_forward(x_nchw, w1, w2):
    # Pure-JAX f32 reference of the PyTorch module (1x1 convs == channel matmuls).
    xf = x_nchw.astype(jnp.float32)
    h = jnp.maximum(
        jnp.einsum("hc,bcxy->bhxy", w1.astype(jnp.float32), xf,
                   precision=jax.lax.Precision.HIGHEST), 0.0)
    y = jnp.einsum("ch,bhxy->bcxy", w2.astype(jnp.float32), h,
                   precision=jax.lax.Precision.HIGHEST)
    return jax.nn.sigmoid(y)


def _run_case(key, B, dim, r, H, W, dtype, tol, fuse=False):
    k_x, k_w1, k_w2 = jax.random.split(key, 3)
    hidden = max(1, dim // r)
    x = jax.random.normal(k_x, (B, dim, H, W), dtype=jnp.float32).astype(dtype)
    # Deterministic synthetic Conv2d 1x1 weights, bias=False (matches the module).
    bound1 = 1.0 / (dim ** 0.5)
    bound2 = 1.0 / (hidden ** 0.5)
    w1 = jax.random.uniform(k_w1, (hidden, dim), jnp.float32, -bound1, bound1)
    w2 = jax.random.uniform(k_w2, (dim, hidden), jnp.float32, -bound2, bound2)

    out = jax.block_until_ready(
        mask_forward(x, w1, w2, fuse_input_multiply=fuse))
    ref = reference_forward(x, w1, w2)
    if fuse:
        ref = ref * x.astype(jnp.float32)
    assert out.shape == (B, dim, H, W)
    err = float(jnp.max(jnp.abs(out.astype(jnp.float32) - ref)))
    assert err < tol, f"max abs err {err} > {tol}"


if __name__ == "__main__":
    key = jax.random.PRNGKey(0)
    k0, k1, k2, k3 = jax.random.split(key, 4)

    # Main case (module default r=16): dim=64, hidden=4, 16x16 map, f32.
    # Grid = (2, 1) parallel steps (keeps both v7x TensorCores busy).
    _run_case(k0, B=2, dim=64, r=16, H=16, W=16, dtype=jnp.float32, tol=1e-4)

    # bf16 activations; B=1 so the spatial extent is split into 2 lane-dense
    # tiles of 512 (>= 2 parallel steps for v7x; half the HBM bytes of f32).
    _run_case(k1, B=1, dim=32, r=8, H=32, W=32, dtype=jnp.bfloat16, tol=3e-2)

    # Small feature map with batch blocking: Bb=2 rows per grid step.
    _run_case(k2, B=4, dim=16, r=4, H=8, W=8, dtype=jnp.float32, tol=1e-4)

    # Optional fused consumer (x * mask); off by default to keep module semantics.
    _run_case(k3, B=2, dim=64, r=16, H=16, W=16, dtype=jnp.float32, tol=1e-4,
              fuse=True)

    print("KERNEL_OK")
</pallas_src>

<mosaic_0001>
module attributes {stable_mosaic.version = 11 : i64} {
  func.func @kernel(%arg0: i32, %arg1: i32, %arg2: memref<1x64x256xf32, #tpu.memory_space<vmem>>, %arg3: memref<4x64xf32, #tpu.memory_space<vmem>>, %arg4: memref<64x4xf32, #tpu.memory_space<vmem>>, %arg5: memref<1x64x256xf32, #tpu.memory_space<vmem>>) attributes {dimension_semantics = [#tpu.dimension_semantics<parallel>, #tpu.dimension_semantics<parallel>], iteration_bounds = array<i64: 2, 1>, scalar_prefetch = 0 : i64, scratch_operands = 0 : i64, tpu.core_type = #tpu.core_type<tc>, window_params = [{transform_indices = @transform_0, window_bounds = array<i64: 1, 64, 256>}, {pipeline_mode = #tpu.pipeline_mode<synchronous>, transform_indices = @transform_1, window_bounds = array<i64: 4, 64>}, {pipeline_mode = #tpu.pipeline_mode<synchronous>, transform_indices = @transform_2, window_bounds = array<i64: 64, 4>}, {transform_indices = @transform_3, window_bounds = array<i64: 1, 64, 256>}]} {
    %c0 = arith.constant 0 : index
    %c0_0 = arith.constant 0 : index
    %0 = vector.load %arg3[%c0, %c0_0] : memref<4x64xf32, #tpu.memory_space<vmem>>, vector<4x64xf32>
    %c0_1 = arith.constant 0 : index
    %c0_2 = arith.constant 0 : index
    %1 = vector.load %arg4[%c0_1, %c0_2] : memref<64x4xf32, #tpu.memory_space<vmem>>, vector<64x4xf32>
    %c0_3 = arith.constant 0 : index
    %c0_4 = arith.constant 0 : index
    %c0_5 = arith.constant 0 : index
    %2 = vector.load %arg2[%c0_3, %c0_4, %c0_5] : memref<1x64x256xf32, #tpu.memory_space<vmem>>, vector<1x64x256xf32>
    %3 = vector.shape_cast %2 : vector<1x64x256xf32> to vector<64x256xf32>
    %cst = arith.constant dense<0.000000e+00> : vector<4x256xf32>
    %4 = tpu.matmul %0, %3, %cst {dimension_numbers = #tpu.dot_dimension_numbers<[1], [0], [0], [1], [0, 0, 1, 1], [], []>, precision = #tpu.contract_precision<fp32>} : vector<4x64xf32>, vector<64x256xf32>, vector<4x256xf32> -> vector<4x256xf32>
    %cst_6 = arith.constant 0.000000e+00 : f32
    %5 = vector.broadcast %cst_6 : f32 to vector<4x256xf32>
    %6 = arith.maximumf %4, %5 : vector<4x256xf32>
    %cst_7 = arith.constant dense<0.000000e+00> : vector<64x256xf32>
    %7 = tpu.matmul %1, %6, %cst_7 {dimension_numbers = #tpu.dot_dimension_numbers<[1], [0], [0], [1], [0, 0, 1, 1], [], []>, precision = #tpu.contract_precision<fp32>} : vector<64x4xf32>, vector<4x256xf32>, vector<64x256xf32> -> vector<64x256xf32>
    %cst_8 = arith.constant 5.000000e-01 : f32
    %8 = vector.broadcast %cst_8 : f32 to vector<64x256xf32>
    %9 = arith.mulf %8, %7 : vector<64x256xf32>
    %10 = math.tanh %9 : vector<64x256xf32>
    %cst_9 = arith.constant 5.000000e-01 : f32
    %11 = vector.broadcast %cst_9 : f32 to vector<64x256xf32>
    %12 = arith.mulf %11, %10 : vector<64x256xf32>
    %cst_10 = arith.constant 5.000000e-01 : f32
    %13 = vector.broadcast %cst_10 : f32 to vector<64x256xf32>
    %14 = arith.addf %12, %13 : vector<64x256xf32>
    %c0_11 = arith.constant 0 : index
    %c0_12 = arith.constant 0 : index
    %c0_13 = arith.constant 0 : index
    %15 = vector.load %arg5[%c0_11, %c0_12, %c0_13] : memref<1x64x256xf32, #tpu.memory_space<vmem>>, vector<1x64x256xf32>
    %16 = vector.shape_cast %15 : vector<1x64x256xf32> to vector<64x256xf32>
    %17 = vector.shape_cast %14 : vector<64x256xf32> to vector<1x64x256xf32>
    tpu.vector_store %arg5[%c0_11, %c0_12, %c0_13], %17 {strides = array<i32>} : memref<1x64x256xf32, #tpu.memory_space<vmem>>, vector<1x64x256xf32>,
    return
  }
  func.func @transform_0(%arg0: i32, %arg1: i32) -> (i32, i32, i32) {
    %c0_i32 = arith.constant 0 : i32
    %c0_i32_0 = arith.constant 0 : i32
    return %arg0, %c0_i32, %arg1 : i32, i32, i32
  }
  func.func @transform_1(%arg0: i32, %arg1: i32) -> (i32, i32) {
    %c0_i32 = arith.constant 0 : i32
    %c0_i32_0 = arith.constant 0 : i32
    %c0_i32_1 = arith.constant 0 : i32
    return %c0_i32, %c0_i32_0 : i32, i32
  }
  func.func @transform_2(%arg0: i32, %arg1: i32) -> (i32, i32) {
    %c0_i32 = arith.constant 0 : i32
    %c0_i32_0 = arith.constant 0 : i32
    %c0_i32_1 = arith.constant 0 : i32
    return %c0_i32, %c0_i32_0 : i32, i32
  }
  func.func @transform_3(%arg0: i32, %arg1: i32) -> (i32, i32, i32) {
    %c0_i32 = arith.constant 0 : i32
    %c0_i32_0 = arith.constant 0 : i32
    return %arg0, %c0_i32, %arg1 : i32, i32, i32
  }
}

</mosaic_0001>

<llo_original>
// kernel: tpu_custom_call.1
$region0: #{tpu_custom_call.1}
  #allocation0 [shape = 'u32[]', space=smem, size = 0x4, offset = 0x4, fixed_abs, tag = 'smem constant byte address 0x4 - core index']
  #allocation1 [shape = 'u32[144,128]{1,0:T(1,128)}', space=vmem, size = 0x12000, scoped, tag = 'internal scratch']
  %s0 = inlined_call_operand.hbm [shape: f32[2,64,256], index: 0, kind: input, shape index: {}]
  %s1 = inlined_call_operand.vmem [shape: f32[4,64], index: 1, kind: input, shape index: {}]
  %s2 = inlined_call_operand.vmem [shape: f32[64,4], index: 2, kind: input, shape index: {}]
  %s3 = inlined_call_operand.hbm [shape: f32[2,64,256], index: 3, kind: output, shape index: {}]
  %s4 = sld [smem:[#allocation0]]
  $region49: #{tpu_custom_call.1} parent=0
    _
  %s6 = ssub.s32 1, %s4
  %s7 = scalar_select 0, %s6, %s4
  $region1: #{tpu_custom_call.1} parent=0
    #allocation2 [shape = 'u8[131072]{0}', space=vmem, size = 0x20000, scoped, tag = 'input window, operand 0']
    #allocation3 [shape = 's32[2]{0}', space=sflag, size = 0x8, scoped, tag = 'scoped memory for tpu_custom_call.1']
    #allocation4 [shape = 's32[2]{0}', space=sflag, size = 0x8, scoped, tag = 'scoped memory for tpu_custom_call.1']
    #allocation5 [shape = 'u8[131072]{0}', space=vmem, size = 0x20000, scoped, tag = 'output window, operand 0']
    %8 = vsyncpa [#allocation3], 0
    %s9 = scalar_lea.sflag [#allocation3], 1
    %10 = vsyncpa %s9, 0
    %11 = vsyncpa [#allocation4], 0
    %s12 = scalar_lea.sflag [#allocation4], 1
    %13 = vsyncpa %s12, 0
    loop: start=0, step=1, limit=4
    $region2: #{tpu_custom_call.1} parent=1 // loop_pre_header
      _
    $region3: #{tpu_custom_call.1} parent=1 // loop_header
      %s15 = sphi 0, %s19
      %p16 = scmp.ge.s32.totalorder %s15, 4
      %s22 = sphi 0, %s34
      %s23 = sphi 0, %s30
      %s24 = sphi 0, %s22
      %s25 = sphi 0, %s23
      %s26 = sphi 0, %s24
      %s27 = sphi 0, %s25
      %s39 = sphi 0, %s41
      %s42 = sphi 0, %s39
      %s43 = sphi 0, %s42
      %s59 = sphi 0, %s43
      %s63 = sphi 0, %s63
      %s65 = sphi 0, %s63
      %s66 = sphi 0, %s65
      %s80 = sphi 0, %s66
      %s84 = sphi 0, %s84
      %s86 = sphi 0, %s84
      %s87 = sphi 0, %s86
      %s101 = sphi 0, %s87
      %s109 = sphi 0, %s111
      %s112 = sphi 0, %s109
      %s113 = sphi 0, %s112
      %s129 = sphi 0, %s113
    $region4: #{tpu_custom_call.1} parent=1 // loop_header_branch
      %18 = sbr.rel (%p16) target = $region8
    $region5: #{tpu_custom_call.1} parent=1 // loop_body
      %s20 = ssub.s32 %s15, 1
      %s21 = ssub.s32 %s15, 2
      %s28 = sadd.s32 1, %s23
      %p29 = scmp.ge.s32.totalorder %s28, 1
      %s30 = scalar_select %p29, 0, %s28
      %s31 = sadd.s32 1, %s22
      %s32 = scalar_select %p29, %s31, %s22
      %p33 = scmp.ge.s32.totalorder %s32, 2
      %s34 = scalar_select %p33, 0, %s32
      %s35 = ssub.s32 %s22, %s34
      %s36 = ssub.s32 %s23, %s30
      %s37 = sor.u32 %s35, %s36
      %p38 = scmp.eq.s32.totalorder %s37, 0
      %s40 = sadd.s32 %s39, 1
      %s41 = scalar_select %p38, %s39, %s40
      %p44 = pneg %p38
      %p45 = scmp.eq.s32.totalorder %s15, 1
      %p46 = por %p44, %p45
      %p47 = scmp.ne.s32.totalorder %s39, %s42
      %p48 = scmp.eq.s32.totalorder %s15, 0
      %p49 = por %p47, %p48
      %p50 = scmp.ne.s32.totalorder %s39, %s42
      %p51 = scmp.eq.s32.totalorder %s20, 1
      %p52 = por %p50, %p51
      %p53 = scmp.ne.s32.totalorder %s42, %s43
      %p54 = scmp.eq.s32.totalorder %s20, 0
      %p55 = por %p53, %p54
      %p56 = scmp.ne.s32.totalorder %s42, %s43
      %p57 = scmp.eq.s32.totalorder %s21, 1
      %p58 = por %p56, %p57
      %p60 = scmp.ne.s32.totalorder %s43, %s59
      %p61 = scmp.eq.s32.totalorder %s21, 0
      %p62 = por %p60, %p61
      %s64 = sadd.s32 %s63, 1
      %p67 = scmp.eq.s32.totalorder %s15, 1
      %p68 = scmp.ne.s32.totalorder %s63, %s65
      %p69 = scmp.eq.s32.totalorder %s15, 0
      %p70 = por %p68, %p69
      %p71 = scmp.ne.s32.totalorder %s63, %s65
      %p72 = scmp.eq.s32.totalorder %s20, 1
      %p73 = por %p71, %p72
      %p74 = scmp.ne.s32.totalorder %s65, %s66
      %p75 = scmp.eq.s32.totalorder %s20, 0
      %p76 = por %p74, %p75
      %p77 = scmp.ne.s32.totalorder %s65, %s66
      %p78 = scmp.eq.s32.totalorder %s21, 1
      %p79 = por %p77, %p78
      %p81 = scmp.ne.s32.totalorder %s66, %s80
      %p82 = scmp.eq.s32.totalorder %s21, 0
      %p83 = por %p81, %p82
      %s85 = sadd.s32 %s84, 1
      %p88 = scmp.eq.s32.totalorder %s15, 1
      %p89 = scmp.ne.s32.totalorder %s84, %s86
      %p90 = scmp.eq.s32.totalorder %s15, 0
      %p91 = por %p89, %p90
      %p92 = scmp.ne.s32.totalorder %s84, %s86
      %p93 = scmp.eq.s32.totalorder %s20, 1
      %p94 = por %p92, %p93
      %p95 = scmp.ne.s32.totalorder %s86, %s87
      %p96 = scmp.eq.s32.totalorder %s20, 0
      %p97 = por %p95, %p96
      %p98 = scmp.ne.s32.totalorder %s86, %s87
      %p99 = scmp.eq.s32.totalorder %s21, 1
      %p100 = por %p98, %p99
      %p102 = scmp.ne.s32.totalorder %s87, %s101
      %p103 = scmp.eq.s32.totalorder %s21, 0
      %p104 = por %p102, %p103
      %s105 = ssub.s32 %s22, %s34
      %s106 = ssub.s32 %s23, %s30
      %s107 = sor.u32 %s105, %s106
      %p108 = scmp.eq.s32.totalorder %s107, 0
      %s110 = sadd.s32 %s109, 1
      %s111 = scalar_select %p108, %s109, %s110
      %p114 = pneg %p108
      %p115 = scmp.eq.s32.totalorder %s15, 1
      %p116 = por %p114, %p115
      %p117 = scmp.ne.s32.totalorder %s109, %s112
      %p118 = scmp.eq.s32.totalorder %s15, 0
      %p119 = por %p117, %p118
      %p120 = scmp.ne.s32.totalorder %s109, %s112
      %p121 = scmp.eq.s32.totalorder %s20, 1
      %p122 = por %p120, %p121
      %p123 = scmp.ne.s32.totalorder %s112, %s113
      %p124 = scmp.eq.s32.totalorder %s20, 0
      %p125 = por %p123, %p124
      %p126 = scmp.ne.s32.totalorder %s112, %s113
      %p127 = scmp.eq.s32.totalorder %s21, 1
      %p128 = por %p126, %p127
      %p130 = scmp.ne.s32.totalorder %s113, %s129
      %p131 = scmp.eq.s32.totalorder %s21, 0
      %p132 = por %p130, %p131
      %p133 = scmp.le.s32.totalorder 1, %s15
      %p134 = scmp.lt.s32.totalorder %s15, 3
      %p135 = pnand %p133, %p134
      %p136 = pneg %p135
      // Predicated region
      $region9: #{tpu_custom_call.1} parent=5 // pred_check
        _
      $region10: #{tpu_custom_call.1} parent=5 // pred_check_branch
        %138 = sbr.rel (%p135) target = $region12
      $region11: #{tpu_custom_call.1} parent=5 // pred_region
        %s139 = ssub.s32 %s15, 1
        // Predicated region
        $region13: #{tpu_custom_call.1} parent=11 // pred_check
          %p140 = pneg %p76
        $region14: #{tpu_custom_call.1} parent=11 // pred_check_branch
          %142 = sbr.rel (%p140) target = $region16
        $region15: #{tpu_custom_call.1} parent=11 // pred_region
          _
        $region16: #{tpu_custom_call.1} parent=11 // pred_fallthru
          _
        // Predicated region
        $region17: #{tpu_custom_call.1} parent=11 // pred_check
          %p143 = pneg %p97
        $region18: #{tpu_custom_call.1} parent=11 // pred_check_branch
          %145 = sbr.rel (%p143) target = $region20
        $region19: #{tpu_custom_call.1} parent=11 // pred_region
          _
        $region20: #{tpu_custom_call.1} parent=11 // pred_fallthru
          _
      $region12: #{tpu_custom_call.1} parent=5 // pred_fallthru
        _
      %p146 = scmp.lt.s32.totalorder %s15, 2
      // Predicated region
      $region21: #{tpu_custom_call.1} parent=5 // pred_check
        %p147 = pneg %p146
      $region22: #{tpu_custom_call.1} parent=5 // pred_check_branch
        %149 = sbr.rel (%p147) target = $region24
      $region23: #{tpu_custom_call.1} parent=5 // pred_region
        // Predicated region
        $region25: #{tpu_custom_call.1} parent=23 // pred_check
          %p150 = pneg %p49
        $region26: #{tpu_custom_call.1} parent=23 // pred_check_branch
          %152 = sbr.rel (%p150) target = $region28
        $region27: #{tpu_custom_call.1} parent=23 // pred_region
          %s153 = sand.u32 %s39, 1
          %s154 = scalar_lea.sflag [#allocation3], %s153
          %s155 = sand.u32 %s39, 1
          %s156 = smul.addr %s155, 128
          %s157 = scalar_lea.vmem [#allocation2], %s156
          %s158 = smul.u32 2, %s23
          %s160 = ssub.s32 2048, 2048
          %161 = vsyncadd %s154, %s160
          %s162 = smul.addr %s22, 16
          %s163 = sadd.s32 %s158, %s162
          %s164 = smul.addr %s163, 128
          %s165 = scalar_lea.hbm %s0, %s164
          %s166 = sshll.u32 %s157, 4
          %s167 = int_to_ptr.vmem [resolvable:$true] %s166
          %172 = dma.hbm_to_vmem [thread:$0]  %s165, 2048, %s167, %s154, 256, 256, 16
        $region28: #{tpu_custom_call.1} parent=23 // pred_fallthru
          _
      $region24: #{tpu_custom_call.1} parent=5 // pred_fallthru
        _
      %p173 = scmp.le.s32.totalorder 1, %s15
      %p174 = scmp.lt.s32.totalorder %s15, 3
      %p175 = pnand %p173, %p174
      %p176 = pneg %p175
      // Predicated region
      $region29: #{tpu_custom_call.1} parent=5 // pred_check
        _
      $region30: #{tpu_custom_call.1} parent=5 // pred_check_branch
        %178 = sbr.rel (%p175) target = $region32
      $region31: #{tpu_custom_call.1} parent=5 // pred_region
        %s179 = ssub.s32 %s15, 1
        %s180 = sand.u32 %s42, 1
        %s181 = scalar_lea.sflag [#allocation3], %s180
        %s182 = sand.u32 %s42, 1
        %s183 = smul.addr %s182, 128
        %s184 = scalar_lea.vmem [#allocation2], %s183
        // Predicated region
        $region33: #{tpu_custom_call.1} parent=31 // pred_check
          %p185 = pneg %p55
        $region34: #{tpu_custom_call.1} parent=31 // pred_check_branch
          %187 = sbr.rel (%p185) target = $region36
        $region35: #{tpu_custom_call.1} parent=31 // pred_region
          %188 = dma.done %s181, 2048
        $region36: #{tpu_custom_call.1} parent=31 // pred_fallthru
          _
        %s189 = sand.u32 %s42, 1
        %s190 = scalar_lea.sflag [#allocation3], %s189
        %s191 = sand.u32 %s42, 1
        %s192 = smul.addr %s191, 128
        %s193 = scalar_lea.vmem [#allocation2], %s192
        %p194 = pneg %p55
        %p195 = pneg %p52
        %p196 = pneg %p76
        %p197 = pneg %p73
        %p198 = pneg %p97
        %p199 = pneg %p94
        %p200 = pneg %p125
        %p201 = pneg %p122
        %s202 = sand.u32 %s112, 1
        %s203 = scalar_lea.sflag [#allocation4], %s202
        %s204 = sand.u32 %s112, 1
        %s205 = smul.addr %s204, 128
        %s206 = scalar_lea.vmem [#allocation5], %s205
        %s207 = smul.u32 2, %s25
        %s208 = smul.u32 2, %s25
        %v209 = vld [vmem:[%s1] sm:$0xf]
        %v210 = vld [vmem:[%s2] sm:$0xff]
        %v211 = vld [vmem:[%s2 + $0x8] sm:$0xff]
        %v212 = vld [vmem:[%s2 + $0x10] sm:$0xff]
        %v213 = vld [vmem:[%s2 + $0x18] sm:$0xff]
        %v214 = vld [vmem:[%s2 + $0x20] sm:$0xff]
        %v215 = vld [vmem:[%s2 + $0x28] sm:$0xff]
        %v216 = vld [vmem:[%s2 + $0x30] sm:$0xff]
        %v217 = vld [vmem:[%s2 + $0x38] sm:$0xff]
        %v218 = vld [vmem:[%s184] sm:$0xff]
        %v219 = vld [vmem:[%s184 + $0x8] sm:$0xff]
        %v220 = vld [vmem:[%s184 + $0x10] sm:$0xff]
        %v221 = vld [vmem:[%s184 + $0x18] sm:$0xff]
        %v222 = vld [vmem:[%s184 + $0x20] sm:$0xff]
        %v223 = vld [vmem:[%s184 + $0x28] sm:$0xff]
        %v224 = vld [vmem:[%s184 + $0x30] sm:$0xff]
        %v225 = vld [vmem:[%s184 + $0x38] sm:$0xff]
        %v226 = vld [vmem:[%s184 + $0x40] sm:$0xff]
        %v227 = vld [vmem:[%s184 + $0x48] sm:$0xff]
        %v228 = vld [vmem:[%s184 + $0x50] sm:$0xff]
        %v229 = vld [vmem:[%s184 + $0x58] sm:$0xff]
        %v230 = vld [vmem:[%s184 + $0x60] sm:$0xff]
        %v231 = vld [vmem:[%s184 + $0x68] sm:$0xff]
        %v232 = vld [vmem:[%s184 + $0x70] sm:$0xff]
        %v233 = vld [vmem:[%s184 + $0x78] sm:$0xff]
        %vm234 = vcmask 523264
        %v236 = vsel %vm234, %v209, 0
        %v238 = vand.u32 %v219, 4294901760
        %239 = vmatprep.subr.mxu0 %v238
        %v240 = vand.u32 %v218, 4294901760
        %241 = vmatpush1.msra.mxu0 %v240
        %v242 = vand.u32 %v221, 4294901760
        %243 = vmatprep.subr.mxu0 %v242
        %v244 = vand.u32 %v220, 4294901760
        %245 = vmatpush1.msra.mxu0 %v244
        %v246 = vand.u32 %v223, 4294901760
        %247 = vmatprep.subr.mxu0 %v246
        %v248 = vand.u32 %v222, 4294901760
        %249 = vmatpush1.msra.mxu0 %v248
        %v250 = vand.u32 %v225, 4294901760
        %251 = vmatprep.subr.mxu0 %v250
        %v252 = vand.u32 %v224, 4294901760
        %253 = vmatpush1.msra.mxu0 %v252
        %v254 = vand.u32 %v227, 4294901760
        %255 = vmatprep.subr.mxu0 %v254
        %v256 = vand.u32 %v226, 4294901760
        %257 = vmatpush1.msra.mxu0 %v256
        %v258 = vand.u32 %v229, 4294901760
        %259 = vmatprep.subr.mxu0 %v258
        %v260 = vand.u32 %v228, 4294901760
        %261 = vmatpush1.msra.mxu0 %v260
        %v262 = vand.u32 %v231, 4294901760
        %263 = vmatprep.subr.mxu0 %v262
        %v264 = vand.u32 %v230, 4294901760
        %265 = vmatpush1.msra.mxu0 %v264
        %v266 = vand.u32 %v233, 4294901760
        %267 = vmatprep.subr.mxu0 %v266
        %v268 = vand.u32 %v232, 4294901760
        %269 = vmatpush1.msra.mxu0 %v268
        %270 = vmatprep.subr.mxu0 0.0
        %271 = vmatpush1.msra.mxu0 0.0
        %272 = vmatprep.subr.mxu0 0.0
        %273 = vmatpush1.msra.mxu0 0.0
        %274 = vmatprep.subr.mxu0 0.0
        %275 = vmatpush1.msra.mxu0 0.0
        %276 = vmatprep.subr.mxu0 0.0
        %277 = vmatpush1.msra.mxu0 0.0
        %278 = vmatprep.subr.mxu0 0.0
        %279 = vmatpush1.msra.mxu0 0.0
        %280 = vmatprep.subr.mxu0 0.0
        %281 = vmatpush1.msra.mxu0 0.0
        %282 = vmatprep.subr.mxu0 0.0
        %283 = vmatpush1.msra.mxu0 0.0
        %284 = vmatprep.subr.mxu0 0.0
        %285 = vmatpush1.msra.mxu0 0.0
        %286 = vmatprep.subr.mxu0 0.0
        %287 = vmatpush1.msra.mxu0 0.0
        %288 = vmatprep.subr.mxu0 0.0
        %289 = vmatpush1.msra.mxu0 0.0
        %290 = vmatprep.subr.mxu0 0.0
        %291 = vmatpush1.msra.mxu0 0.0
        %292 = vmatprep.subr.mxu0 0.0
        %293 = vmatpush1.msra.mxu0 0.0
        %294 = vmatprep.subr.mxu0 0.0
        %295 = vmatpush1.msra.mxu0 0.0
        %296 = vmatprep.subr.mxu0 0.0
        %297 = vmatpush1.msra.mxu0 0.0
        %298 = vmatprep.subr.mxu0 0.0
        %299 = vmatpush1.msra.mxu0 0.0
        %300 = vmatprep.subr.mxu0 0.0
        %301 = vmatpush1.msra.mxu0 0.0
        %302 = vmatprep.subr.mxu0 0.0
        %303 = vmatpush1.msra.mxu0 0.0
        %304 = vmatprep.subr.mxu0 0.0
        %305 = vmatpush1.msra.mxu0 0.0
        %306 = vmatprep.subr.mxu0 0.0
        %307 = vmatpush1.msra.mxu0 0.0
        %308 = vmatprep.subr.mxu0 0.0
        %309 = vmatpush1.msra.mxu0 0.0
        %310 = vmatprep.subr.mxu0 0.0
        %311 = vmatpush1.msra.mxu0 0.0
        %312 = vmatprep.subr.mxu0 0.0
        %313 = vmatpush1.msra.mxu0 0.0
        %314 = vmatprep.subr.mxu0 0.0
        %315 = vmatpush1.msra.mxu0 0.0
        %316 = vmatprep.subr.mxu0 0.0
        %317 = vmatpush1.msra.mxu0 0.0
        %318 = vmatprep.mubr.f32.mxu0 0.0
        %v319 = vand.u32 %v236, 4294901760
        %v320 = vsub.f32 %v236, %v319
        %v321 = vand.u32 %v320, 4294901760
        %v322 = vsub.f32 %v320, %v321
        %v323 = vand.u32 %v322, 4294901760
        %324 = vmatmul.mubr.f32.gmra.mrb[0].mxu0 %v323
        %v325 = vpop.f32.mrb[0].mxu0
        %v326 = vadd.f32 0.0, %v325
        %v327 = vpop.f32.mrb[0].mxu0
        %v328 = vadd.f32 0.0, %v327
        %329 = vdwg.mxu0
        %v330 = vand.u32 %v219, 4294901760
        %v331 = vsub.f32 %v219, %v330
        %v332 = vand.u32 %v331, 4294901760
        %v333 = vsub.f32 %v331, %v332
        %v334 = vand.u32 %v333, 4294901760
        %335 = vmatprep.subr.mxu0 %v334
        %v336 = vand.u32 %v218, 4294901760
        %v337 = vsub.f32 %v218, %v336
        %v338 = vand.u32 %v337, 4294901760
        %v339 = vsub.f32 %v337, %v338
        %v340 = vand.u32 %v339, 4294901760
        %341 = vmatpush1.msra.mxu0 %v340
        %v342 = vand.u32 %v221, 4294901760
        %v343 = vsub.f32 %v221, %v342
        %v344 = vand.u32 %v343, 4294901760
        %v345 = vsub.f32 %v343, %v344
        %v346 = vand.u32 %v345, 4294901760
        %347 = vmatprep.subr.mxu0 %v346
        %v348 = vand.u32 %v220, 4294901760
        %v349 = vsub.f32 %v220, %v348
        %v350 = vand.u32 %v349, 4294901760
        %v351 = vsub.f32 %v349, %v350
        %v352 = vand.u32 %v351, 4294901760
        %353 = vmatpush1.msra.mxu0 %v352
        %v354 = vand.u32 %v223, 4294901760
        %v355 = vsub.f32 %v223, %v354
        %v356 = vand.u32 %v355, 4294901760
        %v357 = vsub.f32 %v355, %v356
        %v358 = vand.u32 %v357, 4294901760
        %359 = vmatprep.subr.mxu0 %v358
        %v360 = vand.u32 %v222, 4294901760
        %v361 = vsub.f32 %v222, %v360
        %v362 = vand.u32 %v361, 4294901760
        %v363 = vsub.f32 %v361, %v362
        %v364 = vand.u32 %v363, 4294901760
        %365 = vmatpush1.msra.mxu0 %v364
        %v366 = vand.u32 %v225, 4294901760
        %v367 = vsub.f32 %v225, %v366
        %v368 = vand.u32 %v367, 4294901760
        %v369 = vsub.f32 %v367, %v368
        %v370 = vand.u32 %v369, 4294901760
        %371 = vmatprep.subr.mxu0 %v370
        %v372 = vand.u32 %v224, 4294901760
        %v373 = vsub.f32 %v224, %v372
        %v374 = vand.u32 %v373, 4294901760
        %v375 = vsub.f32 %v373, %v374
        %v376 = vand.u32 %v375, 4294901760
        %377 = vmatpush1.msra.mxu0 %v376
        %v378 = vand.u32 %v227, 4294901760
        %v379 = vsub.f32 %v227, %v378
        %v380 = vand.u32 %v379, 4294901760
        %v381 = vsub.f32 %v379, %v380
        %v382 = vand.u32 %v381, 4294901760
        %383 = vmatprep.subr.mxu0 %v382
        %v384 = vand.u32 %v226, 4294901760
        %v385 = vsub.f32 %v226, %v384
        %v386 = vand.u32 %v385, 4294901760
        %v387 = vsub.f32 %v385, %v386
        %v388 = vand.u32 %v387, 4294901760
        %389 = vmatpush1.msra.mxu0 %v388
        %v390 = vand.u32 %v229, 4294901760
        %v391 = vsub.f32 %v229, %v390
        %v392 = vand.u32 %v391, 4294901760
        %v393 = vsub.f32 %v391, %v392
        %v394 = vand.u32 %v393, 4294901760
        %395 = vmatprep.subr.mxu0 %v394
        %v396 = vand.u32 %v228, 4294901760
        %v397 = vsub.f32 %v228, %v396
        %v398 = vand.u32 %v397, 4294901760
        %v399 = vsub.f32 %v397, %v398
        %v400 = vand.u32 %v399, 4294901760
        %401 = vmatpush1.msra.mxu0 %v400
        %v402 = vand.u32 %v231, 4294901760
        %v403 = vsub.f32 %v231, %v402
        %v404 = vand.u32 %v403, 4294901760
        %v405 = vsub.f32 %v403, %v404
        %v406 = vand.u32 %v405, 4294901760
        %407 = vmatprep.subr.mxu0 %v406
        %v408 = vand.u32 %v230, 4294901760
        %v409 = vsub.f32 %v230, %v408
        %v410 = vand.u32 %v409, 4294901760
        %v411 = vsub.f32 %v409, %v410
        %v412 = vand.u32 %v411, 4294901760
        %413 = vmatpush1.msra.mxu0 %v412
        %v414 = vand.u32 %v233, 4294901760
        %v415 = vsub.f32 %v233, %v414
        %v416 = vand.u32 %v415, 4294901760
        %v417 = vsub.f32 %v415, %v416
        %v418 = vand.u32 %v417, 4294901760
        %419 = vmatprep.subr.mxu0 %v418
        %v420 = vand.u32 %v232, 4294901760
        %v421 = vsub.f32 %v232, %v420
        %v422 = vand.u32 %v421, 4294901760
        %v423 = vsub.f32 %v421, %v422
        %v424 = vand.u32 %v423, 4294901760
        %425 = vmatpush1.msra.mxu0 %v424
        %426 = vmatprep.subr.mxu0 0.0
        %427 = vmatpush1.msra.mxu0 0.0
        %428 = vmatprep.subr.mxu0 0.0
        %429 = vmatpush1.msra.mxu0 0.0
        %430 = vmatprep.subr.mxu0 0.0
        %431 = vmatpush1.msra.mxu0 0.0
        %432 = vmatprep.subr.mxu0 0.0
        %433 = vmatpush1.msra.mxu0 0.0
        %434 = vmatprep.subr.mxu0 0.0
        %435 = vmatpush1.msra.mxu0 0.0
        %436 = vmatprep.subr.mxu0 0.0
        %437 = vmatpush1.msra.mxu0 0.0
        %438 = vmatprep.subr.mxu0 0.0
        %439 = vmatpush1.msra.mxu0 0.0
        %440 = vmatprep.subr.mxu0 0.0
        %441 = vmatpush1.msra.mxu0 0.0
        %442 = vmatprep.subr.mxu0 0.0
        %443 = vmatpush1.msra.mxu0 0.0
        %444 = vmatprep.subr.mxu0 0.0
        %445 = vmatpush1.msra.mxu0 0.0
        %446 = vmatprep.subr.mxu0 0.0
        %447 = vmatpush1.msra.mxu0 0.0
        %448 = vmatprep.subr.mxu0 0.0
        %449 = vmatpush1.msra.mxu0 0.0
        %450 = vmatprep.subr.mxu0 0.0
        %451 = vmatpush1.msra.mxu0 0.0
        %452 = vmatprep.subr.mxu0 0.0
        %453 = vmatpush1.msra.mxu0 0.0
        %454 = vmatprep.subr.mxu0 0.0
        %455 = vmatpush1.msra.mxu0 0.0
        %456 = vmatprep.subr.mxu0 0.0
        %457 = vmatpush1.msra.mxu0 0.0
        %458 = vmatprep.subr.mxu0 0.0
        %459 = vmatpush1.msra.mxu0 0.0
        %460 = vmatprep.subr.mxu0 0.0
        %461 = vmatpush1.msra.mxu0 0.0
        %462 = vmatprep.subr.mxu0 0.0
        %463 = vmatpush1.msra.mxu0 0.0
        %464 = vmatprep.subr.mxu0 0.0
        %465 = vmatpush1.msra.mxu0 0.0
        %466 = vmatprep.subr.mxu0 0.0
        %467 = vmatpush1.msra.mxu0 0.0
        %468 = vmatprep.subr.mxu0 0.0
        %469 = vmatpush1.msra.mxu0 0.0
        %470 = vmatprep.subr.mxu0 0.0
        %471 = vmatpush1.msra.mxu0 0.0
        %472 = vmatprep.subr.mxu0 0.0
        %473 = vmatpush1.msra.mxu0 0.0
        %474 = vmatprep.mubr.f32.mxu0 0.0
        %v475 = vand.u32 %v236, 4294901760
        %476 = vmatmul.mubr.f32.gmra.mrb[0].mxu0 %v475
        %v477 = vpop.f32.mrb[0].mxu0
        %v478 = vadd.f32 %v326, %v477
        %v479 = vpop.f32.mrb[0].mxu0
        %v480 = vadd.f32 %v328, %v479
        %481 = vdwg.mxu0
        %v482 = vand.u32 %v219, 4294901760
        %v483 = vsub.f32 %v219, %v482
        %484 = vmatprep.subr.mxu0 %v483
        %v485 = vand.u32 %v218, 4294901760
        %v486 = vsub.f32 %v218, %v485
        %487 = vmatpush1.msra.mxu0 %v486
        %v488 = vand.u32 %v221, 4294901760
        %v489 = vsub.f32 %v221, %v488
        %490 = vmatprep.subr.mxu0 %v489
        %v491 = vand.u32 %v220, 4294901760
        %v492 = vsub.f32 %v220, %v491
        %493 = vmatpush1.msra.mxu0 %v492
        %v494 = vand.u32 %v223, 4294901760
        %v495 = vsub.f32 %v223, %v494
        %496 = vmatprep.subr.mxu0 %v495
        %v497 = vand.u32 %v222, 4294901760
        %v498 = vsub.f32 %v222, %v497
        %499 = vmatpush1.msra.mxu0 %v498
        %v500 = vand.u32 %v225, 4294901760
        %v501 = vsub.f32 %v225, %v500
        %502 = vmatprep.subr.mxu0 %v501
        %v503 = vand.u32 %v224, 4294901760
        %v504 = vsub.f32 %v224, %v503
        %505 = vmatpush1.msra.mxu0 %v504
        %v506 = vand.u32 %v227, 4294901760
        %v507 = vsub.f32 %v227, %v506
        %508 = vmatprep.subr.mxu0 %v507
        %v509 = vand.u32 %v226, 4294901760
        %v510 = vsub.f32 %v226, %v509
        %511 = vmatpush1.msra.mxu0 %v510
        %v512 = vand.u32 %v229, 4294901760
        %v513 = vsub.f32 %v229, %v512
        %514 = vmatprep.subr.mxu0 %v513
        %v515 = vand.u32 %v228, 4294901760
        %v516 = vsub.f32 %v228, %v515
        %517 = vmatpush1.msra.mxu0 %v516
        %v518 = vand.u32 %v231, 4294901760
        %v519 = vsub.f32 %v231, %v518
        %520 = vmatprep.subr.mxu0 %v519
        %v521 = vand.u32 %v230, 4294901760
        %v522 = vsub.f32 %v230, %v521
        %523 = vmatpush1.msra.mxu0 %v522
        %v524 = vand.u32 %v233, 4294901760
        %v525 = vsub.f32 %v233, %v524
        %526 = vmatprep.subr.mxu0 %v525
        %v527 = vand.u32 %v232, 4294901760
        %v528 = vsub.f32 %v232, %v527
        %529 = vmatpush1.msra.mxu0 %v528
        %530 = vmatprep.subr.mxu0 0.0
        %531 = vmatpush1.msra.mxu0 0.0
        %532 = vmatprep.subr.mxu0 0.0
        %533 = vmatpush1.msra.mxu0 0.0
        %534 = vmatprep.subr.mxu0 0.0
        %535 = vmatpush1.msra.mxu0 0.0
        %536 = vmatprep.subr.mxu0 0.0
        %537 = vmatpush1.msra.mxu0 0.0
        %538 = vmatprep.subr.mxu0 0.0
        %539 = vmatpush1.msra.mxu0 0.0
        %540 = vmatprep.subr.mxu0 0.0
        %541 = vmatpush1.msra.mxu0 0.0
        %542 = vmatprep.subr.mxu0 0.0
        %543 = vmatpush1.msra.mxu0 0.0
        %544 = vmatprep.subr.mxu0 0.0
        %545 = vmatpush1.msra.mxu0 0.0
        %546 = vmatprep.subr.mxu0 0.0
        %547 = vmatpush1.msra.mxu0 0.0
        %548 = vmatprep.subr.mxu0 0.0
        %549 = vmatpush1.msra.mxu0 0.0
        %550 = vmatprep.subr.mxu0 0.0
        %551 = vmatpush1.msra.mxu0 0.0
        %552 = vmatprep.subr.mxu0 0.0
        %553 = vmatpush1.msra.mxu0 0.0
        %554 = vmatprep.subr.mxu0 0.0
        %555 = vmatpush1.msra.mxu0 0.0
        %556 = vmatprep.subr.mxu0 0.0
        %557 = vmatpush1.msra.mxu0 0.0
        %558 = vmatprep.subr.mxu0 0.0
        %559 = vmatpush1.msra.mxu0 0.0
        %560 = vmatprep.subr.mxu0 0.0
        %561 = vmatpush1.msra.mxu0 0.0
        %562 = vmatprep.subr.mxu0 0.0
        %563 = vmatpush1.msra.mxu0 0.0
        %564 = vmatprep.subr.mxu0 0.0
        %565 = vmatpush1.msra.mxu0 0.0
        %566 = vmatprep.subr.mxu0 0.0
        %567 = vmatpush1.msra.mxu0 0.0
        %568 = vmatprep.subr.mxu0 0.0
        %569 = vmatpush1.msra.mxu0 0.0
        %570 = vmatprep.subr.mxu0 0.0
        %571 = vmatpush1.msra.mxu0 0.0
        %572 = vmatprep.subr.mxu0 0.0
        %573 = vmatpush1.msra.mxu0 0.0
        %574 = vmatprep.subr.mxu0 0.0
        %575 = vmatpush1.msra.mxu0 0.0
        %576 = vmatprep.subr.mxu0 0.0
        %577 = vmatpush1.msra.mxu0 0.0
        %578 = vmatprep.mubr.f32.mxu0 0.0
        %v579 = vand.u32 %v236, 4294901760
        %v580 = vsub.f32 %v236, %v579
        %581 = vmatmul.mubr.f32.gmra.mrb[0].mxu0 %v580
        %v582 = vpop.f32.mrb[0].mxu0
        %v583 = vadd.f32 %v478, %v582
        %v584 = vpop.f32.mrb[0].mxu0
        %v585 = vadd.f32 %v480, %v584
        %586 = vdwg.mxu0
        %v587 = vand.u32 %v219, 4294901760
        %588 = vmatprep.subr.mxu0 %v587
        %v589 = vand.u32 %v218, 4294901760
        %590 = vmatpush1.msra.mxu0 %v589
        %v591 = vand.u32 %v221, 4294901760
        %592 = vmatprep.subr.mxu0 %v591
        %v593 = vand.u32 %v220, 4294901760
        %594 = vmatpush1.msra.mxu0 %v593
        %v595 = vand.u32 %v223, 4294901760
        %596 = vmatprep.subr.mxu0 %v595
        %v597 = vand.u32 %v222, 4294901760
        %598 = vmatpush1.msra.mxu0 %v597
        %v599 = vand.u32 %v225, 4294901760
        %600 = vmatprep.subr.mxu0 %v599
        %v601 = vand.u32 %v224, 4294901760
        %602 = vmatpush1.msra.mxu0 %v601
        %v603 = vand.u32 %v227, 4294901760
        %604 = vmatprep.subr.mxu0 %v603
        %v605 = vand.u32 %v226, 4294901760
        %606 = vmatpush1.msra.mxu0 %v605
        %v607 = vand.u32 %v229, 4294901760
        %608 = vmatprep.subr.mxu0 %v607
        %v609 = vand.u32 %v228, 4294901760
        %610 = vmatpush1.msra.mxu0 %v609
        %v611 = vand.u32 %v231, 4294901760
        %612 = vmatprep.subr.mxu0 %v611
        %v613 = vand.u32 %v230, 4294901760
        %614 = vmatpush1.msra.mxu0 %v613
        %v615 = vand.u32 %v233, 4294901760
        %616 = vmatprep.subr.mxu0 %v615
        %v617 = vand.u32 %v232, 4294901760
        %618 = vmatpush1.msra.mxu0 %v617
        %619 = vmatprep.subr.mxu0 0.0
        %620 = vmatpush1.msra.mxu0 0.0
        %621 = vmatprep.subr.mxu0 0.0
        %622 = vmatpush1.msra.mxu0 0.0
        %623 = vmatprep.subr.mxu0 0.0
        %624 = vmatpush1.msra.mxu0 0.0
        %625 = vmatprep.subr.mxu0 0.0
        %626 = vmatpush1.msra.mxu0 0.0
        %627 = vmatprep.subr.mxu0 0.0
        %628 = vmatpush1.msra.mxu0 0.0
        %629 = vmatprep.subr.mxu0 0.0
        %630 = vmatpush1.msra.mxu0 0.0
        %631 = vmatprep.subr.mxu0 0.0
        %632 = vmatpush1.msra.mxu0 0.0
        %633 = vmatprep.subr.mxu0 0.0
        %634 = vmatpush1.msra.mxu0 0.0
        %635 = vmatprep.subr.mxu0 0.0
        %636 = vmatpush1.msra.mxu0 0.0
        %637 = vmatprep.subr.mxu0 0.0
        %638 = vmatpush1.msra.mxu0 0.0
        %639 = vmatprep.subr.mxu0 0.0
        %640 = vmatpush1.msra.mxu0 0.0
        %641 = vmatprep.subr.mxu0 0.0
        %642 = vmatpush1.msra.mxu0 0.0
        %643 = vmatprep.subr.mxu0 0.0
        %644 = vmatpush1.msra.mxu0 0.0
        %645 = vmatprep.subr.mxu0 0.0
        %646 = vmatpush1.msra.mxu0 0.0
        %647 = vmatprep.subr.mxu0 0.0
        %648 = vmatpush1.msra.mxu0 0.0
        %649 = vmatprep.subr.mxu0 0.0
        %650 = vmatpush1.msra.mxu0 0.0
        %651 = vmatprep.subr.mxu0 0.0
        %652 = vmatpush1.msra.mxu0 0.0
        %653 = vmatprep.subr.mxu0 0.0
        %654 = vmatpush1.msra.mxu0 0.0
        %655 = vmatprep.subr.mxu0 0.0
        %656 = vmatpush1.msra.mxu0 0.0
        %657 = vmatprep.subr.mxu0 0.0
        %658 = vmatpush1.msra.mxu0 0.0
        %659 = vmatprep.subr.mxu0 0.0
        %660 = vmatpush1.msra.mxu0 0.0
        %661 = vmatprep.subr.mxu0 0.0
        %662 = vmatpush1.msra.mxu0 0.0
        %663 = vmatprep.subr.mxu0 0.0
        %664 = vmatpush1.msra.mxu0 0.0
        %665 = vmatprep.subr.mxu0 0.0
        %666 = vmatpush1.msra.mxu0 0.0
        %667 = vmatprep.mubr.f32.mxu0 0.0
        %v668 = vand.u32 %v236, 4294901760
        %v669 = vsub.f32 %v236, %v668
        %v670 = vand.u32 %v669, 4294901760
        %671 = vmatmul.mubr.f32.gmra.mrb[0].mxu0 %v670
        %v672 = vpop.f32.mrb[0].mxu0
        %v673 = vadd.f32 %v583, %v672
        %v674 = vpop.f32.mrb[0].mxu0
        %v675 = vadd.f32 %v585, %v674
        %676 = vdwg.mxu0
        %v677 = vand.u32 %v219, 4294901760
        %v678 = vsub.f32 %v219, %v677
        %v679 = vand.u32 %v678, 4294901760
        %680 = vmatprep.subr.mxu0 %v679
        %v681 = vand.u32 %v218, 4294901760
        %v682 = vsub.f32 %v218, %v681
        %v683 = vand.u32 %v682, 4294901760
        %684 = vmatpush1.msra.mxu0 %v683
        %v685 = vand.u32 %v221, 4294901760
        %v686 = vsub.f32 %v221, %v685
        %v687 = vand.u32 %v686, 4294901760
        %688 = vmatprep.subr.mxu0 %v687
        %v689 = vand.u32 %v220, 4294901760
        %v690 = vsub.f32 %v220, %v689
        %v691 = vand.u32 %v690, 4294901760
        %692 = vmatpush1.msra.mxu0 %v691
        %v693 = vand.u32 %v223, 4294901760
        %v694 = vsub.f32 %v223, %v693
        %v695 = vand.u32 %v694, 4294901760
        %696 = vmatprep.subr.mxu0 %v695
        %v697 = vand.u32 %v222, 4294901760
        %v698 = vsub.f32 %v222, %v697
        %v699 = vand.u32 %v698, 4294901760
        %700 = vmatpush1.msra.mxu0 %v699
        %v701 = vand.u32 %v225, 4294901760
        %v702 = vsub.f32 %v225, %v701
        %v703 = vand.u32 %v702, 4294901760
        %704 = vmatprep.subr.mxu0 %v703
        %v705 = vand.u32 %v224, 4294901760
        %v706 = vsub.f32 %v224, %v705
        %v707 = vand.u32 %v706, 4294901760
        %708 = vmatpush1.msra.mxu0 %v707
        %v709 = vand.u32 %v227, 4294901760
        %v710 = vsub.f32 %v227, %v709
        %v711 = vand.u32 %v710, 4294901760
        %712 = vmatprep.subr.mxu0 %v711
        %v713 = vand.u32 %v226, 4294901760
        %v714 = vsub.f32 %v226, %v713
        %v715 = vand.u32 %v714, 4294901760
        %716 = vmatpush1.msra.mxu0 %v715
        %v717 = vand.u32 %v229, 4294901760
        %v718 = vsub.f32 %v229, %v717
        %v719 = vand.u32 %v718, 4294901760
        %720 = vmatprep.subr.mxu0 %v719
        %v721 = vand.u32 %v228, 4294901760
        %v722 = vsub.f32 %v228, %v721
        %v723 = vand.u32 %v722, 4294901760
        %724 = vmatpush1.msra.mxu0 %v723
        %v725 = vand.u32 %v231, 4294901760
        %v726 = vsub.f32 %v231, %v725
        %v727 = vand.u32 %v726, 4294901760
        %728 = vmatprep.subr.mxu0 %v727
        %v729 = vand.u32 %v230, 4294901760
        %v730 = vsub.f32 %v230, %v729
        %v731 = vand.u32 %v730, 4294901760
        %732 = vmatpush1.msra.mxu0 %v731
        %v733 = vand.u32 %v233, 4294901760
        %v734 = vsub.f32 %v233, %v733
        %v735 = vand.u32 %v734, 4294901760
        %736 = vmatprep.subr.mxu0 %v735
        %v737 = vand.u32 %v232, 4294901760
        %v738 = vsub.f32 %v232, %v737
        %v739 = vand.u32 %v738, 4294901760
        %740 = vmatpush1.msra.mxu0 %v739
        %741 = vmatprep.subr.mxu0 0.0
        %742 = vmatpush1.msra.mxu0 0.0
        %743 = vmatprep.subr.mxu0 0.0
        %744 = vmatpush1.msra.mxu0 0.0
        %745 = vmatprep.subr.mxu0 0.0
        %746 = vmatpush1.msra.mxu0 0.0
        %747 = vmatprep.subr.mxu0 0.0
        %748 = vmatpush1.msra.mxu0 0.0
        %749 = vmatprep.subr.mxu0 0.0
        %750 = vmatpush1.msra.mxu0 0.0
        %751 = vmatprep.subr.mxu0 0.0
        %752 = vmatpush1.msra.mxu0 0.0
        %753 = vmatprep.subr.mxu0 0.0
        %754 = vmatpush1.msra.mxu0 0.0
        %755 = vmatprep.subr.mxu0 0.0
        %756 = vmatpush1.msra.mxu0 0.0
        %757 = vmatprep.subr.mxu0 0.0
        %758 = vmatpush1.msra.mxu0 0.0
        %759 = vmatprep.subr.mxu0 0.0
        %760 = vmatpush1.msra.mxu0 0.0
        %761 = vmatprep.subr.mxu0 0.0
        %762 = vmatpush1.msra.mxu0 0.0
        %763 = vmatprep.subr.mxu0 0.0
        %764 = vmatpush1.msra.mxu0 0.0
        %765 = vmatprep.subr.mxu0 0.0
        %766 = vmatpush1.msra.mxu0 0.0
        %767 = vmatprep.subr.mxu0 0.0
        %768 = vmatpush1.msra.mxu0 0.0
        %769 = vmatprep.subr.mxu0 0.0
        %770 = vmatpush1.msra.mxu0 0.0
        %771 = vmatprep.subr.mxu0 0.0
        %772 = vmatpush1.msra.mxu0 0.0
        %773 = vmatprep.subr.mxu0 0.0
        %774 = vmatpush1.msra.mxu0 0.0
        %775 = vmatprep.subr.mxu0 0.0
        %776 = vmatpush1.msra.mxu0 0.0
        %777 = vmatprep.subr.mxu0 0.0
        %778 = vmatpush1.msra.mxu0 0.0
        %779 = vmatprep.subr.mxu0 0.0
        %780 = vmatpush1.msra.mxu0 0.0
        %781 = vmatprep.subr.mxu0 0.0
        %782 = vmatpush1.msra.mxu0 0.0
        %783 = vmatprep.subr.mxu0 0.0
        %784 = vmatpush1.msra.mxu0 0.0
        %785 = vmatprep.subr.mxu0 0.0
        %786 = vmatpush1.msra.mxu0 0.0
        %787 = vmatprep.subr.mxu0 0.0
        %788 = vmatpush1.msra.mxu0 0.0
        %789 = vmatprep.mubr.f32.mxu0 0.0
        %v790 = vand.u32 %v236, 4294901760
        %791 = vmatmul.mubr.f32.gmra.mrb[0].mxu0 %v790
        %v792 = vpop.f32.mrb[0].mxu0
        %v793 = vadd.f32 %v673, %v792
        %v794 = vpop.f32.mrb[0].mxu0
        %v795 = vadd.f32 %v675, %v794
        %796 = vdwg.mxu0
        %v797 = vand.u32 %v219, 4294901760
        %798 = vmatprep.subr.mxu0 %v797
        %v799 = vand.u32 %v218, 4294901760
        %800 = vmatpush1.msra.mxu0 %v799
        %v801 = vand.u32 %v221, 4294901760
        %802 = vmatprep.subr.mxu0 %v801
        %v803 = vand.u32 %v220, 4294901760
        %804 = vmatpush1.msra.mxu0 %v803
        %v805 = vand.u32 %v223, 4294901760
        %806 = vmatprep.subr.mxu0 %v805
        %v807 = vand.u32 %v222, 4294901760
        %808 = vmatpush1.msra.mxu0 %v807
        %v809 = vand.u32 %v225, 4294901760
        %810 = vmatprep.subr.mxu0 %v809
        %v811 = vand.u32 %v224, 4294901760
        %812 = vmatpush1.msra.mxu0 %v811
        %v813 = vand.u32 %v227, 4294901760
        %814 = vmatprep.subr.mxu0 %v813
        %v815 = vand.u32 %v226, 4294901760
        %816 = vmatpush1.msra.mxu0 %v815
        %v817 = vand.u32 %v229, 4294901760
        %818 = vmatprep.subr.mxu0 %v817
        %v819 = vand.u32 %v228, 4294901760
        %820 = vmatpush1.msra.mxu0 %v819
        %v821 = vand.u32 %v231, 4294901760
        %822 = vmatprep.subr.mxu0 %v821
        %v823 = vand.u32 %v230, 4294901760
        %824 = vmatpush1.msra.mxu0 %v823
        %v825 = vand.u32 %v233, 4294901760
        %826 = vmatprep.subr.mxu0 %v825
        %v827 = vand.u32 %v232, 4294901760
        %828 = vmatpush1.msra.mxu0 %v827
        %829 = vmatprep.subr.mxu0 0.0
        %830 = vmatpush1.msra.mxu0 0.0
        %831 = vmatprep.subr.mxu0 0.0
        %832 = vmatpush1.msra.mxu0 0.0
        %833 = vmatprep.subr.mxu0 0.0
        %834 = vmatpush1.msra.mxu0 0.0
        %835 = vmatprep.subr.mxu0 0.0
        %836 = vmatpush1.msra.mxu0 0.0
        %837 = vmatprep.subr.mxu0 0.0
        %838 = vmatpush1.msra.mxu0 0.0
        %839 = vmatprep.subr.mxu0 0.0
        %840 = vmatpush1.msra.mxu0 0.0
        %841 = vmatprep.subr.mxu0 0.0
        %842 = vmatpush1.msra.mxu0 0.0
        %843 = vmatprep.subr.mxu0 0.0
        %844 = vmatpush1.msra.mxu0 0.0
        %845 = vmatprep.subr.mxu0 0.0
        %846 = vmatpush1.msra.mxu0 0.0
        %847 = vmatprep.subr.mxu0 0.0
        %848 = vmatpush1.msra.mxu0 0.0
        %849 = vmatprep.subr.mxu0 0.0
        %850 = vmatpush1.msra.mxu0 0.0
        %851 = vmatprep.subr.mxu0 0.0
        %852 = vmatpush1.msra.mxu0 0.0
        %853 = vmatprep.subr.mxu0 0.0
        %854 = vmatpush1.msra.mxu0 0.0
        %855 = vmatprep.subr.mxu0 0.0
        %856 = vmatpush1.msra.mxu0 0.0
        %857 = vmatprep.subr.mxu0 0.0
        %858 = vmatpush1.msra.mxu0 0.0
        %859 = vmatprep.subr.mxu0 0.0
        %860 = vmatpush1.msra.mxu0 0.0
        %861 = vmatprep.subr.mxu0 0.0
        %862 = vmatpush1.msra.mxu0 0.0
        %863 = vmatprep.subr.mxu0 0.0
        %864 = vmatpush1.msra.mxu0 0.0
        %865 = vmatprep.subr.mxu0 0.0
        %866 = vmatpush1.msra.mxu0 0.0
        %867 = vmatprep.subr.mxu0 0.0
        %868 = vmatpush1.msra.mxu0 0.0
        %869 = vmatprep.subr.mxu0 0.0
        %870 = vmatpush1.msra.mxu0 0.0
        %871 = vmatprep.subr.mxu0 0.0
        %872 = vmatpush1.msra.mxu0 0.0
        %873 = vmatprep.subr.mxu0 0.0
        %874 = vmatpush1.msra.mxu0 0.0
        %875 = vmatprep.subr.mxu0 0.0
        %876 = vmatpush1.msra.mxu0 0.0
        %877 = vmatprep.mubr.f32.mxu0 0.0
        %v878 = vand.u32 %v236, 4294901760
        %879 = vmatmul.mubr.f32.gmra.mrb[0].mxu0 %v878
        %v880 = vpop.f32.mrb[0].mxu0
        %v881 = vadd.f32 %v793, %v880
        %v882 = vpop.f32.mrb[0].mxu0
        %v883 = vadd.f32 %v795, %v882
        %884 = vdwg.mxu0
        %v885 = vmax.f32 %v881, 0.0
        %v886 = vmax.f32 %v883, 0.0
        %vm887 = vcmask 31744
        %v889 = vsel %vm887, %v210, 0
        %v892 = vsel %vm887, %v211, 0
        %v895 = vsel %vm887, %v212, 0
        %v898 = vsel %vm887, %v213, 0
        %v901 = vsel %vm887, %v214, 0
        %v904 = vsel %vm887, %v215, 0
        %v907 = vsel %vm887, %v216, 0
        %v910 = vsel %vm887, %v217, 0
        %vm912 = vcmask 1043456
        %v914 = vsel %vm912, %v885, 0
        %v917 = vsel %vm912, %v886, 0
        %v919 = vand.u32 %v917, 4294901760
        %920 = vmatprep.subr.mxu0 %v919
        %v921 = vand.u32 %v914, 4294901760
        %922 = vmatpush1.msra.mxu0 %v921
        %923 = vmatprep.subr.mxu0 0.0
        %924 = vmatpush1.msra.mxu0 0.0
        %925 = vmatprep.subr.mxu0 0.0
        %926 = vmatpush1.msra.mxu0 0.0
        %927 = vmatprep.subr.mxu0 0.0
        %928 = vmatpush1.msra.mxu0 0.0
        %929 = vmatprep.subr.mxu0 0.0
        %930 = vmatpush1.msra.mxu0 0.0
        %931 = vmatprep.subr.mxu0 0.0
        %932 = vmatpush1.msra.mxu0 0.0
        %933 = vmatprep.subr.mxu0 0.0
        %934 = vmatpush1.msra.mxu0 0.0
        %935 = vmatprep.subr.mxu0 0.0
        %936 = vmatpush1.msra.mxu0 0.0
        %937 = vmatprep.subr.mxu0 0.0
        %938 = vmatpush1.msra.mxu0 0.0
        %939 = vmatprep.subr.mxu0 0.0
        %940 = vmatpush1.msra.mxu0 0.0
        %941 = vmatprep.subr.mxu0 0.0
        %942 = vmatpush1.msra.mxu0 0.0
        %943 = vmatprep.subr.mxu0 0.0
        %944 = vmatpush1.msra.mxu0 0.0
        %945 = vmatprep.subr.mxu0 0.0
        %946 = vmatpush1.msra.mxu0 0.0
        %947 = vmatprep.subr.mxu0 0.0
        %948 = vmatpush1.msra.mxu0 0.0
        %949 = vmatprep.subr.mxu0 0.0
        %950 = vmatpush1.msra.mxu0 0.0
        %951 = vmatprep.subr.mxu0 0.0
        %952 = vmatpush1.msra.mxu0 0.0
        %953 = vmatprep.subr.mxu0 0.0
        %954 = vmatpush1.msra.mxu0 0.0
        %955 = vmatprep.subr.mxu0 0.0
        %956 = vmatpush1.msra.mxu0 0.0
        %957 = vmatprep.subr.mxu0 0.0
        %958 = vmatpush1.msra.mxu0 0.0
        %959 = vmatprep.subr.mxu0 0.0
        %960 = vmatpush1.msra.mxu0 0.0
        %961 = vmatprep.subr.mxu0 0.0
        %962 = vmatpush1.msra.mxu0 0.0
        %963 = vmatprep.subr.mxu0 0.0
        %964 = vmatpush1.msra.mxu0 0.0
        %965 = vmatprep.subr.mxu0 0.0
        %966 = vmatpush1.msra.mxu0 0.0
        %967 = vmatprep.subr.mxu0 0.0
        %968 = vmatpush1.msra.mxu0 0.0
        %969 = vmatprep.subr.mxu0 0.0
        %970 = vmatpush1.msra.mxu0 0.0
        %971 = vmatprep.subr.mxu0 0.0
        %972 = vmatpush1.msra.mxu0 0.0
        %973 = vmatprep.subr.mxu0 0.0
        %974 = vmatpush1.msra.mxu0 0.0
        %975 = vmatprep.subr.mxu0 0.0
        %976 = vmatpush1.msra.mxu0 0.0
        %977 = vmatprep.subr.mxu0 0.0
        %978 = vmatpush1.msra.mxu0 0.0
        %979 = vmatprep.subr.mxu0 0.0
        %980 = vmatpush1.msra.mxu0 0.0
        %981 = vmatprep.subr.mxu0 0.0
        %982 = vmatpush1.msra.mxu0 0.0
        %983 = vmatprep.subr.mxu0 0.0
        %984 = vmatpush1.msra.mxu0 0.0
        %985 = vmatprep.mubr.f32.mxu0 0.0
        %v986 = vand.u32 %v889, 4294901760
        %v987 = vsub.f32 %v889, %v986
        %v988 = vand.u32 %v987, 4294901760
        %v989 = vsub.f32 %v987, %v988
        %v990 = vand.u32 %v989, 4294901760
        %991 = vmatmul.mubr.f32.gmra.mrb[0].mxu0 %v990
        %v992 = vpop.f32.mrb[0].mxu0
        %v993 = vadd.f32 0.0, %v992
        %v994 = vpop.f32.mrb[0].mxu0
        %v995 = vadd.f32 0.0, %v994
        %996 = vmatprep.mubr.f32.mxu0 0.0
        %v997 = vand.u32 %v892, 4294901760
        %v998 = vsub.f32 %v892, %v997
        %v999 = vand.u32 %v998, 4294901760
        %v1000 = vsub.f32 %v998, %v999
        %v1001 = vand.u32 %v1000, 4294901760
        %1002 = vmatmul.mubr.f32.gmra.mrb[0].mxu0 %v1001
        %v1003 = vpop.f32.mrb[0].mxu0
        %v1004 = vadd.f32 0.0, %v1003
        %v1005 = vpop.f32.mrb[0].mxu0
        %v1006 = vadd.f32 0.0, %v1005
        %1007 = vmatprep.mubr.f32.mxu0 0.0
        %v1008 = vand.u32 %v895, 4294901760
        %v1009 = vsub.f32 %v895, %v1008
        %v1010 = vand.u32 %v1009, 4294901760
        %v1011 = vsub.f32 %v1009, %v1010
        %v1012 = vand.u32 %v1011, 4294901760
        %1013 = vmatmul.mubr.f32.gmra.mrb[0].mxu0 %v1012
        %v1014 = vpop.f32.mrb[0].mxu0
        %v1015 = vadd.f32 0.0, %v1014
        %v1016 = vpop.f32.mrb[0].mxu0
        %v1017 = vadd.f32 0.0, %v1016
        %1018 = vmatprep.mubr.f32.mxu0 0.0
        %v1019 = vand.u32 %v898, 4294901760
        %v1020 = vsub.f32 %v898, %v1019
        %v1021 = vand.u32 %v1020, 4294901760
        %v1022 = vsub.f32 %v1020, %v1021
        %v1023 = vand.u32 %v1022, 4294901760
        %1024 = vmatmul.mubr.f32.gmra.mrb[0].mxu0 %v1023
        %v1025 = vpop.f32.mrb[0].mxu0
        %v1026 = vadd.f32 0.0, %v1025
        %v1027 = vpop.f32.mrb[0].mxu0
        %v1028 = vadd.f32 0.0, %v1027
        %1029 = vmatprep.mubr.f32.mxu0 0.0
        %v1030 = vand.u32 %v901, 4294901760
        %v1031 = vsub.f32 %v901, %v1030
        %v1032 = vand.u32 %v1031, 4294901760
        %v1033 = vsub.f32 %v1031, %v1032
        %v1034 = vand.u32 %v1033, 4294901760
        %1035 = vmatmul.mubr.f32.gmra.mrb[0].mxu0 %v1034
        %v1036 = vpop.f32.mrb[0].mxu0
        %v1037 = vadd.f32 0.0, %v1036
        %v1038 = vpop.f32.mrb[0].mxu0
        %v1039 = vadd.f32 0.0, %v1038
        %1040 = vmatprep.mubr.f32.mxu0 0.0
        %v1041 = vand.u32 %v904, 4294901760
        %v1042 = vsub.f32 %v904, %v1041
        %v1043 = vand.u32 %v1042, 4294901760
        %v1044 = vsub.f32 %v1042, %v1043
        %v1045 = vand.u32 %v1044, 4294901760
        %1046 = vmatmul.mubr.f32.gmra.mrb[0].mxu0 %v1045
        %v1047 = vpop.f32.mrb[0].mxu0
        %v1048 = vadd.f32 0.0, %v1047
        %v1049 = vpop.f32.mrb[0].mxu0
        %v1050 = vadd.f32 0.0, %v1049
        %1051 = vmatprep.mubr.f32.mxu0 0.0
        %v1052 = vand.u32 %v907, 4294901760
        %v1053 = vsub.f32 %v907, %v1052
        %v1054 = vand.u32 %v1053, 4294901760
        %v1055 = vsub.f32 %v1053, %v1054
        %v1056 = vand.u32 %v1055, 4294901760
        %1057 = vmatmul.mubr.f32.gmra.mrb[0].mxu0 %v1056
        %v1058 = vpop.f32.mrb[0].mxu0
        %v1059 = vadd.f32 0.0, %v1058
        %v1060 = vpop.f32.mrb[0].mxu0
        %v1061 = vadd.f32 0.0, %v1060
        %1062 = vmatprep.mubr.f32.mxu0 0.0
        %v1063 = vand.u32 %v910, 4294901760
        %v1064 = vsub.f32 %v910, %v1063
        %v1065 = vand.u32 %v1064, 4294901760
        %v1066 = vsub.f32 %v1064, %v1065
        %v1067 = vand.u32 %v1066, 4294901760
        %1068 = vmatmul.mubr.f32.gmra.mrb[0].mxu0 %v1067
        %v1069 = vpop.f32.mrb[0].mxu0
        %v1070 = vadd.f32 0.0, %v1069
        %v1071 = vpop.f32.mrb[0].mxu0
        %v1072 = vadd.f32 0.0, %v1071
        %1073 = vdwg.mxu0
        %v1074 = vand.u32 %v917, 4294901760
        %v1075 = vsub.f32 %v917, %v1074
        %v1076 = vand.u32 %v1075, 4294901760
        %v1077 = vsub.f32 %v1075, %v1076
        %v1078 = vand.u32 %v1077, 4294901760
        %1079 = vmatprep.subr.mxu0 %v1078
        %v1080 = vand.u32 %v914, 4294901760
        %v1081 = vsub.f32 %v914, %v1080
        %v1082 = vand.u32 %v1081, 4294901760
        %v1083 = vsub.f32 %v1081, %v1082
        %v1084 = vand.u32 %v1083, 4294901760
        %1085 = vmatpush1.msra.mxu0 %v1084
        %1086 = vmatprep.subr.mxu0 0.0
        %1087 = vmatpush1.msra.mxu0 0.0
        %1088 = vmatprep.subr.mxu0 0.0
        %1089 = vmatpush1.msra.mxu0 0.0
        %1090 = vmatprep.subr.mxu0 0.0
        %1091 = vmatpush1.msra.mxu0 0.0
        %1092 = vmatprep.subr.mxu0 0.0
        %1093 = vmatpush1.msra.mxu0 0.0
        %1094 = vmatprep.subr.mxu0 0.0
        %1095 = vmatpush1.msra.mxu0 0.0
        %1096 = vmatprep.subr.mxu0 0.0
        %1097 = vmatpush1.msra.mxu0 0.0
        %1098 = vmatprep.subr.mxu0 0.0
        %1099 = vmatpush1.msra.mxu0 0.0
        %1100 = vmatprep.subr.mxu0 0.0
        %1101 = vmatpush1.msra.mxu0 0.0
        %1102 = vmatprep.subr.mxu0 0.0
        %1103 = vmatpush1.msra.mxu0 0.0
        %1104 = vmatprep.subr.mxu0 0.0
        %1105 = vmatpush1.msra.mxu0 0.0
        %1106 = vmatprep.subr.mxu0 0.0
        %1107 = vmatpush1.msra.mxu0 0.0
        %1108 = vmatprep.subr.mxu0 0.0
        %1109 = vmatpush1.msra.mxu0 0.0
        %1110 = vmatprep.subr.mxu0 0.0
        %1111 = vmatpush1.msra.mxu0 0.0
        %1112 = vmatprep.subr.mxu0 0.0
        %1113 = vmatpush1.msra.mxu0 0.0
        %1114 = vmatprep.subr.mxu0 0.0
        %1115 = vmatpush1.msra.mxu0 0.0
        %1116 = vmatprep.subr.mxu0 0.0
        %1117 = vmatpush1.msra.mxu0 0.0
        %1118 = vmatprep.subr.mxu0 0.0
        %1119 = vmatpush1.msra.mxu0 0.0
        %1120 = vmatprep.subr.mxu0 0.0
        %1121 = vmatpush1.msra.mxu0 0.0
        %1122 = vmatprep.subr.mxu0 0.0
        %1123 = vmatpush1.msra.mxu0 0.0
        %1124 = vmatprep.subr.mxu0 0.0
        %1125 = vmatpush1.msra.mxu0 0.0
        %1126 = vmatprep.subr.mxu0 0.0
        %1127 = vmatpush1.msra.mxu0 0.0
        %1128 = vmatprep.subr.mxu0 0.0
        %1129 = vmatpush1.msra.mxu0 0.0
        %1130 = vmatprep.subr.mxu0 0.0
        %1131 = vmatpush1.msra.mxu0 0.0
        %1132 = vmatprep.subr.mxu0 0.0
        %1133 = vmatpush1.msra.mxu0 0.0
        %1134 = vmatprep.subr.mxu0 0.0
        %1135 = vmatpush1.msra.mxu0 0.0
        %1136 = vmatprep.subr.mxu0 0.0
        %1137 = vmatpush1.msra.mxu0 0.0
        %1138 = vmatprep.subr.mxu0 0.0
        %1139 = vmatpush1.msra.mxu0 0.0
        %1140 = vmatprep.subr.mxu0 0.0
        %1141 = vmatpush1.msra.mxu0 0.0
        %1142 = vmatprep.subr.mxu0 0.0
        %1143 = vmatpush1.msra.mxu0 0.0
        %1144 = vmatprep.subr.mxu0 0.0
        %1145 = vmatpush1.msra.mxu0 0.0
        %1146 = vmatprep.subr.mxu0 0.0
        %1147 = vmatpush1.msra.mxu0 0.0
        %1148 = vmatprep.mubr.f32.mxu0 0.0
        %v1149 = vand.u32 %v889, 4294901760
        %1150 = vmatmul.mubr.f32.gmra.mrb[0].mxu0 %v1149
        %v1151 = vpop.f32.mrb[0].mxu0
        %v1152 = vadd.f32 %v993, %v1151
        %v1153 = vpop.f32.mrb[0].mxu0
        %v1154 = vadd.f32 %v995, %v1153
        %1155 = vmatprep.mubr.f32.mxu0 0.0
        %v1156 = vand.u32 %v892, 4294901760
        %1157 = vmatmul.mubr.f32.gmra.mrb[0].mxu0 %v1156
        %v1158 = vpop.f32.mrb[0].mxu0
        %v1159 = vadd.f32 %v1004, %v1158
        %v1160 = vpop.f32.mrb[0].mxu0
        %v1161 = vadd.f32 %v1006, %v1160
        %1162 = vmatprep.mubr.f32.mxu0 0.0
        %v1163 = vand.u32 %v895, 4294901760
        %1164 = vmatmul.mubr.f32.gmra.mrb[0].mxu0 %v1163
        %v1165 = vpop.f32.mrb[0].mxu0
        %v1166 = vadd.f32 %v1015, %v1165
        %v1167 = vpop.f32.mrb[0].mxu0
        %v1168 = vadd.f32 %v1017, %v1167
        %1169 = vmatprep.mubr.f32.mxu0 0.0
        %v1170 = vand.u32 %v898, 4294901760
        %1171 = vmatmul.mubr.f32.gmra.mrb[0].mxu0 %v1170
        %v1172 = vpop.f32.mrb[0].mxu0
        %v1173 = vadd.f32 %v1026, %v1172
        %v1174 = vpop.f32.mrb[0].mxu0
        %v1175 = vadd.f32 %v1028, %v1174
        %1176 = vmatprep.mubr.f32.mxu0 0.0
        %v1177 = vand.u32 %v901, 4294901760
        %1178 = vmatmul.mubr.f32.gmra.mrb[0].mxu0 %v1177
        %v1179 = vpop.f32.mrb[0].mxu0
        %v1180 = vadd.f32 %v1037, %v1179
        %v1181 = vpop.f32.mrb[0].mxu0
        %v1182 = vadd.f32 %v1039, %v1181
        %1183 = vmatprep.mubr.f32.mxu0 0.0
        %v1184 = vand.u32 %v904, 4294901760
        %1185 = vmatmul.mubr.f32.gmra.mrb[0].mxu0 %v1184
        %v1186 = vpop.f32.mrb[0].mxu0
        %v1187 = vadd.f32 %v1048, %v1186
        %v1188 = vpop.f32.mrb[0].mxu0
        %v1189 = vadd.f32 %v1050, %v1188
        %1190 = vmatprep.mubr.f32.mxu0 0.0
        %v1191 = vand.u32 %v907, 4294901760
        %1192 = vmatmul.mubr.f32.gmra.mrb[0].mxu0 %v1191
        %v1193 = vpop.f32.mrb[0].mxu0
        %v1194 = vadd.f32 %v1059, %v1193
        %v1195 = vpop.f32.mrb[0].mxu0
        %v1196 = vadd.f32 %v1061, %v1195
        %1197 = vmatprep.mubr.f32.mxu0 0.0
        %v1198 = vand.u32 %v910, 4294901760
        %1199 = vmatmul.mubr.f32.gmra.mrb[0].mxu0 %v1198
        %v1200 = vpop.f32.mrb[0].mxu0
        %v1201 = vadd.f32 %v1070, %v1200
        %v1202 = vpop.f32.mrb[0].mxu0
        %v1203 = vadd.f32 %v1072, %v1202
        %1204 = vdwg.mxu0
        %v1205 = vand.u32 %v917, 4294901760
        %v1206 = vsub.f32 %v917, %v1205
        %1207 = vmatprep.subr.mxu0 %v1206
        %v1208 = vand.u32 %v914, 4294901760
        %v1209 = vsub.f32 %v914, %v1208
        %1210 = vmatpush1.msra.mxu0 %v1209
        %1211 = vmatprep.subr.mxu0 0.0
        %1212 = vmatpush1.msra.mxu0 0.0
        %1213 = vmatprep.subr.mxu0 0.0
        %1214 = vmatpush1.msra.mxu0 0.0
        %1215 = vmatprep.subr.mxu0 0.0
        %1216 = vmatpush1.msra.mxu0 0.0
        %1217 = vmatprep.subr.mxu0 0.0
        %1218 = vmatpush1.msra.mxu0 0.0
        %1219 = vmatprep.subr.mxu0 0.0
        %1220 = vmatpush1.msra.mxu0 0.0
        %1221 = vmatprep.subr.mxu0 0.0
        %1222 = vmatpush1.msra.mxu0 0.0
        %1223 = vmatprep.subr.mxu0 0.0
        %1224 = vmatpush1.msra.mxu0 0.0
        %1225 = vmatprep.subr.mxu0 0.0
        %1226 = vmatpush1.msra.mxu0 0.0
        %1227 = vmatprep.subr.mxu0 0.0
        %1228 = vmatpush1.msra.mxu0 0.0
        %1229 = vmatprep.subr.mxu0 0.0
        %1230 = vmatpush1.msra.mxu0 0.0
        %1231 = vmatprep.subr.mxu0 0.0
        %1232 = vmatpush1.msra.mxu0 0.0
        %1233 = vmatprep.subr.mxu0 0.0
        %1234 = vmatpush1.msra.mxu0 0.0
        %1235 = vmatprep.subr.mxu0 0.0
        %1236 = vmatpush1.msra.mxu0 0.0
        %1237 = vmatprep.subr.mxu0 0.0
        %1238 = vmatpush1.msra.mxu0 0.0
        %1239 = vmatprep.subr.mxu0 0.0
        %1240 = vmatpush1.msra.mxu0 0.0
        %1241 = vmatprep.subr.mxu0 0.0
        %1242 = vmatpush1.msra.mxu0 0.0
        %1243 = vmatprep.subr.mxu0 0.0
        %1244 = vmatpush1.msra.mxu0 0.0
        %1245 = vmatprep.subr.mxu0 0.0
        %1246 = vmatpush1.msra.mxu0 0.0
        %1247 = vmatprep.subr.mxu0 0.0
        %1248 = vmatpush1.msra.mxu0 0.0
        %1249 = vmatprep.subr.mxu0 0.0
        %1250 = vmatpush1.msra.mxu0 0.0
        %1251 = vmatprep.subr.mxu0 0.0
        %1252 = vmatpush1.msra.mxu0 0.0
        %1253 = vmatprep.subr.mxu0 0.0
        %1254 = vmatpush1.msra.mxu0 0.0
        %1255 = vmatprep.subr.mxu0 0.0
        %1256 = vmatpush1.msra.mxu0 0.0
        %1257 = vmatprep.subr.mxu0 0.0
        %1258 = vmatpush1.msra.mxu0 0.0
        %1259 = vmatprep.subr.mxu0 0.0
        %1260 = vmatpush1.msra.mxu0 0.0
        %1261 = vmatprep.subr.mxu0 0.0
        %1262 = vmatpush1.msra.mxu0 0.0
        %1263 = vmatprep.subr.mxu0 0.0
        %1264 = vmatpush1.msra.mxu0 0.0
        %1265 = vmatprep.subr.mxu0 0.0
        %1266 = vmatpush1.msra.mxu0 0.0
        %1267 = vmatprep.subr.mxu0 0.0
        %1268 = vmatpush1.msra.mxu0 0.0
        %1269 = vmatprep.subr.mxu0 0.0
        %1270 = vmatpush1.msra.mxu0 0.0
        %1271 = vmatprep.subr.mxu0 0.0
        %1272 = vmatpush1.msra.mxu0 0.0
        %1273 = vmatprep.mubr.f32.mxu0 0.0
        %v1274 = vand.u32 %v889, 4294901760
        %v1275 = vsub.f32 %v889, %v1274
        %1276 = vmatmul.mubr.f32.gmra.mrb[0].mxu0 %v1275
        %v1277 = vpop.f32.mrb[0].mxu0
        %v1278 = vadd.f32 %v1152, %v1277
        %v1279 = vpop.f32.mrb[0].mxu0
        %v1280 = vadd.f32 %v1154, %v1279
        %1281 = vmatprep.mubr.f32.mxu0 0.0
        %v1282 = vand.u32 %v892, 4294901760
        %v1283 = vsub.f32 %v892, %v1282
        %1284 = vmatmul.mubr.f32.gmra.mrb[0].mxu0 %v1283
        %v1285 = vpop.f32.mrb[0].mxu0
        %v1286 = vadd.f32 %v1159, %v1285
        %v1287 = vpop.f32.mrb[0].mxu0
        %v1288 = vadd.f32 %v1161, %v1287
        %1289 = vmatprep.mubr.f32.mxu0 0.0
        %v1290 = vand.u32 %v895, 4294901760
        %v1291 = vsub.f32 %v895, %v1290
        %1292 = vmatmul.mubr.f32.gmra.mrb[0].mxu0 %v1291
        %v1293 = vpop.f32.mrb[0].mxu0
        %v1294 = vadd.f32 %v1166, %v1293
        %v1295 = vpop.f32.mrb[0].mxu0
        %v1296 = vadd.f32 %v1168, %v1295
        %1297 = vmatprep.mubr.f32.mxu0 0.0
        %v1298 = vand.u32 %v898, 4294901760
        %v1299 = vsub.f32 %v898, %v1298
        %1300 = vmatmul.mubr.f32.gmra.mrb[0].mxu0 %v1299
        %v1301 = vpop.f32.mrb[0].mxu0
        %v1302 = vadd.f32 %v1173, %v1301
        %v1303 = vpop.f32.mrb[0].mxu0
        %v1304 = vadd.f32 %v1175, %v1303
        %1305 = vmatprep.mubr.f32.mxu0 0.0
        %v1306 = vand.u32 %v901, 4294901760
        %v1307 = vsub.f32 %v901, %v1306
        %1308 = vmatmul.mubr.f32.gmra.mrb[0].mxu0 %v1307
        %v1309 = vpop.f32.mrb[0].mxu0
        %v1310 = vadd.f32 %v1180, %v1309
        %v1311 = vpop.f32.mrb[0].mxu0
        %v1312 = vadd.f32 %v1182, %v1311
        %1313 = vmatprep.mubr.f32.mxu0 0.0
        %v1314 = vand.u32 %v904, 4294901760
        %v1315 = vsub.f32 %v904, %v1314
        %1316 = vmatmul.mubr.f32.gmra.mrb[0].mxu0 %v1315
        %v1317 = vpop.f32.mrb[0].mxu0
        %v1318 = vadd.f32 %v1187, %v1317
        %v1319 = vpop.f32.mrb[0].mxu0
        %v1320 = vadd.f32 %v1189, %v1319
        %1321 = vmatprep.mubr.f32.mxu0 0.0
        %v1322 = vand.u32 %v907, 4294901760
        %v1323 = vsub.f32 %v907, %v1322
        %1324 = vmatmul.mubr.f32.gmra.mrb[0].mxu0 %v1323
        %v1325 = vpop.f32.mrb[0].mxu0
        %v1326 = vadd.f32 %v1194, %v1325
        %v1327 = vpop.f32.mrb[0].mxu0
        %v1328 = vadd.f32 %v1196, %v1327
        %1329 = vmatprep.mubr.f32.mxu0 0.0
        %v1330 = vand.u32 %v910, 4294901760
        %v1331 = vsub.f32 %v910, %v1330
        %1332 = vmatmul.mubr.f32.gmra.mrb[0].mxu0 %v1331
        %v1333 = vpop.f32.mrb[0].mxu0
        %v1334 = vadd.f32 %v1201, %v1333
        %v1335 = vpop.f32.mrb[0].mxu0
        %v1336 = vadd.f32 %v1203, %v1335
        %1337 = vdwg.mxu0
        %v1338 = vand.u32 %v917, 4294901760
        %1339 = vmatprep.subr.mxu0 %v1338
        %v1340 = vand.u32 %v914, 4294901760
        %1341 = vmatpush1.msra.mxu0 %v1340
        %1342 = vmatprep.subr.mxu0 0.0
        %1343 = vmatpush1.msra.mxu0 0.0
        %1344 = vmatprep.subr.mxu0 0.0
        %1345 = vmatpush1.msra.mxu0 0.0
        %1346 = vmatprep.subr.mxu0 0.0
        %1347 = vmatpush1.msra.mxu0 0.0
        %1348 = vmatprep.subr.mxu0 0.0
        %1349 = vmatpush1.msra.mxu0 0.0
        %1350 = vmatprep.subr.mxu0 0.0
        %1351 = vmatpush1.msra.mxu0 0.0
        %1352 = vmatprep.subr.mxu0 0.0
        %1353 = vmatpush1.msra.mxu0 0.0
        %1354 = vmatprep.subr.mxu0 0.0
        %1355 = vmatpush1.msra.mxu0 0.0
        %1356 = vmatprep.subr.mxu0 0.0
        %1357 = vmatpush1.msra.mxu0 0.0
        %1358 = vmatprep.subr.mxu0 0.0
        %1359 = vmatpush1.msra.mxu0 0.0
        %1360 = vmatprep.subr.mxu0 0.0
        %1361 = vmatpush1.msra.mxu0 0.0
        %1362 = vmatprep.subr.mxu0 0.0
        %1363 = vmatpush1.msra.mxu0 0.0
        %1364 = vmatprep.subr.mxu0 0.0
        %1365 = vmatpush1.msra.mxu0 0.0
        %1366 = vmatprep.subr.mxu0 0.0
        %1367 = vmatpush1.msra.mxu0 0.0
        %1368 = vmatprep.subr.mxu0 0.0
        %1369 = vmatpush1.msra.mxu0 0.0
        %1370 = vmatprep.subr.mxu0 0.0
        %1371 = vmatpush1.msra.mxu0 0.0
        %1372 = vmatprep.subr.mxu0 0.0
        %1373 = vmatpush1.msra.mxu0 0.0
        %1374 = vmatprep.subr.mxu0 0.0
        %1375 = vmatpush1.msra.mxu0 0.0
        %1376 = vmatprep.subr.mxu0 0.0
        %1377 = vmatpush1.msra.mxu0 0.0
        %1378 = vmatprep.subr.mxu0 0.0
        %1379 = vmatpush1.msra.mxu0 0.0
        %1380 = vmatprep.subr.mxu0 0.0
        %1381 = vmatpush1.msra.mxu0 0.0
        %1382 = vmatprep.subr.mxu0 0.0
        %1383 = vmatpush1.msra.mxu0 0.0
        %1384 = vmatprep.subr.mxu0 0.0
        %1385 = vmatpush1.msra.mxu0 0.0
        %1386 = vmatprep.subr.mxu0 0.0
        %1387 = vmatpush1.msra.mxu0 0.0
        %1388 = vmatprep.subr.mxu0 0.0
        %1389 = vmatpush1.msra.mxu0 0.0
        %1390 = vmatprep.subr.mxu0 0.0
        %1391 = vmatpush1.msra.mxu0 0.0
        %1392 = vmatprep.subr.mxu0 0.0
        %1393 = vmatpush1.msra.mxu0 0.0
        %1394 = vmatprep.subr.mxu0 0.0
        %1395 = vmatpush1.msra.mxu0 0.0
        %1396 = vmatprep.subr.mxu0 0.0
        %1397 = vmatpush1.msra.mxu0 0.0
        %1398 = vmatprep.subr.mxu0 0.0
        %1399 = vmatpush1.msra.mxu0 0.0
        %1400 = vmatprep.subr.mxu0 0.0
        %1401 = vmatpush1.msra.mxu0 0.0
        %1402 = vmatprep.subr.mxu0 0.0
        %1403 = vmatpush1.msra.mxu0 0.0
        %1404 = vmatprep.mubr.f32.mxu0 0.0
        %v1405 = vand.u32 %v889, 4294901760
        %v1406 = vsub.f32 %v889, %v1405
        %v1407 = vand.u32 %v1406, 4294901760
        %1408 = vmatmul.mubr.f32.gmra.mrb[0].mxu0 %v1407
        %v1409 = vpop.f32.mrb[0].mxu0
        %v1410 = vadd.f32 %v1278, %v1409
        %v1411 = vpop.f32.mrb[0].mxu0
        %v1412 = vadd.f32 %v1280, %v1411
        %1413 = vmatprep.mubr.f32.mxu0 0.0
        %v1414 = vand.u32 %v892, 4294901760
        %v1415 = vsub.f32 %v892, %v1414
        %v1416 = vand.u32 %v1415, 4294901760
        %1417 = vmatmul.mubr.f32.gmra.mrb[0].mxu0 %v1416
        %v1418 = vpop.f32.mrb[0].mxu0
        %v1419 = vadd.f32 %v1286, %v1418
        %v1420 = vpop.f32.mrb[0].mxu0
        %v1421 = vadd.f32 %v1288, %v1420
        %1422 = vmatprep.mubr.f32.mxu0 0.0
        %v1423 = vand.u32 %v895, 4294901760
        %v1424 = vsub.f32 %v895, %v1423
        %v1425 = vand.u32 %v1424, 4294901760
        %1426 = vmatmul.mubr.f32.gmra.mrb[0].mxu0 %v1425
        %v1427 = vpop.f32.mrb[0].mxu0
        %v1428 = vadd.f32 %v1294, %v1427
        %v1429 = vpop.f32.mrb[0].mxu0
        %v1430 = vadd.f32 %v1296, %v1429
        %1431 = vmatprep.mubr.f32.mxu0 0.0
        %v1432 = vand.u32 %v898, 4294901760
        %v1433 = vsub.f32 %v898, %v1432
        %v1434 = vand.u32 %v1433, 4294901760
        %1435 = vmatmul.mubr.f32.gmra.mrb[0].mxu0 %v1434
        %v1436 = vpop.f32.mrb[0].mxu0
        %v1437 = vadd.f32 %v1302, %v1436
        %v1438 = vpop.f32.mrb[0].mxu0
        %v1439 = vadd.f32 %v1304, %v1438
        %1440 = vmatprep.mubr.f32.mxu0 0.0
        %v1441 = vand.u32 %v901, 4294901760
        %v1442 = vsub.f32 %v901, %v1441
        %v1443 = vand.u32 %v1442, 4294901760
        %1444 = vmatmul.mubr.f32.gmra.mrb[0].mxu0 %v1443
        %v1445 = vpop.f32.mrb[0].mxu0
        %v1446 = vadd.f32 %v1310, %v1445
        %v1447 = vpop.f32.mrb[0].mxu0
        %v1448 = vadd.f32 %v1312, %v1447
        %1449 = vmatprep.mubr.f32.mxu0 0.0
        %v1450 = vand.u32 %v904, 4294901760
        %v1451 = vsub.f32 %v904, %v1450
        %v1452 = vand.u32 %v1451, 4294901760
        %1453 = vmatmul.mubr.f32.gmra.mrb[0].mxu0 %v1452
        %v1454 = vpop.f32.mrb[0].mxu0
        %v1455 = vadd.f32 %v1318, %v1454
        %v1456 = vpop.f32.mrb[0].mxu0
        %v1457 = vadd.f32 %v1320, %v1456
        %1458 = vmatprep.mubr.f32.mxu0 0.0
        %v1459 = vand.u32 %v907, 4294901760
        %v1460 = vsub.f32 %v907, %v1459
        %v1461 = vand.u32 %v1460, 4294901760
        %1462 = vmatmul.mubr.f32.gmra.mrb[0].mxu0 %v1461
        %v1463 = vpop.f32.mrb[0].mxu0
        %v1464 = vadd.f32 %v1326, %v1463
        %v1465 = vpop.f32.mrb[0].mxu0
        %v1466 = vadd.f32 %v1328, %v1465
        %1467 = vmatprep.mubr.f32.mxu0 0.0
        %v1468 = vand.u32 %v910, 4294901760
        %v1469 = vsub.f32 %v910, %v1468
        %v1470 = vand.u32 %v1469, 4294901760
        %1471 = vmatmul.mubr.f32.gmra.mrb[0].mxu0 %v1470
        %v1472 = vpop.f32.mrb[0].mxu0
        %v1473 = vadd.f32 %v1334, %v1472
        %v1474 = vpop.f32.mrb[0].mxu0
        %v1475 = vadd.f32 %v1336, %v1474
        %1476 = vdwg.mxu0
        %v1477 = vand.u32 %v917, 4294901760
        %v1478 = vsub.f32 %v917, %v1477
        %v1479 = vand.u32 %v1478, 4294901760
        %1480 = vmatprep.subr.mxu0 %v1479
        %v1481 = vand.u32 %v914, 4294901760
        %v1482 = vsub.f32 %v914, %v1481
        %v1483 = vand.u32 %v1482, 4294901760
        %1484 = vmatpush1.msra.mxu0 %v1483
        %1485 = vmatprep.subr.mxu0 0.0
        %1486 = vmatpush1.msra.mxu0 0.0
        %1487 = vmatprep.subr.mxu0 0.0
        %1488 = vmatpush1.msra.mxu0 0.0
        %1489 = vmatprep.subr.mxu0 0.0
        %1490 = vmatpush1.msra.mxu0 0.0
        %1491 = vmatprep.subr.mxu0 0.0
        %1492 = vmatpush1.msra.mxu0 0.0
        %1493 = vmatprep.subr.mxu0 0.0
        %1494 = vmatpush1.msra.mxu0 0.0
        %1495 = vmatprep.subr.mxu0 0.0
        %1496 = vmatpush1.msra.mxu0 0.0
        %1497 = vmatprep.subr.mxu0 0.0
        %1498 = vmatpush1.msra.mxu0 0.0
        %1499 = vmatprep.subr.mxu0 0.0
        %1500 = vmatpush1.msra.mxu0 0.0
        %1501 = vmatprep.subr.mxu0 0.0
        %1502 = vmatpush1.msra.mxu0 0.0
        %1503 = vmatprep.subr.mxu0 0.0
        %1504 = vmatpush1.msra.mxu0 0.0
        %1505 = vmatprep.subr.mxu0 0.0
        %1506 = vmatpush1.msra.mxu0 0.0
        %1507 = vmatprep.subr.mxu0 0.0
        %1508 = vmatpush1.msra.mxu0 0.0
        %1509 = vmatprep.subr.mxu0 0.0
        %1510 = vmatpush1.msra.mxu0 0.0
        %1511 = vmatprep.subr.mxu0 0.0
        %1512 = vmatpush1.msra.mxu0 0.0
        %1513 = vmatprep.subr.mxu0 0.0
        %1514 = vmatpush1.msra.mxu0 0.0
        %1515 = vmatprep.subr.mxu0 0.0
        %1516 = vmatpush1.msra.mxu0 0.0
        %1517 = vmatprep.subr.mxu0 0.0
        %1518 = vmatpush1.msra.mxu0 0.0
        %1519 = vmatprep.subr.mxu0 0.0
        %1520 = vmatpush1.msra.mxu0 0.0
        %1521 = vmatprep.subr.mxu0 0.0
        %1522 = vmatpush1.msra.mxu0 0.0
        %1523 = vmatprep.subr.mxu0 0.0
        %1524 = vmatpush1.msra.mxu0 0.0
        %1525 = vmatprep.subr.mxu0 0.0
        %1526 = vmatpush1.msra.mxu0 0.0
        %1527 = vmatprep.subr.mxu0 0.0
        %1528 = vmatpush1.msra.mxu0 0.0
        %1529 = vmatprep.subr.mxu0 0.0
        %1530 = vmatpush1.msra.mxu0 0.0
        %1531 = vmatprep.subr.mxu0 0.0
        %1532 = vmatpush1.msra.mxu0 0.0
        %1533 = vmatprep.subr.mxu0 0.0
        %1534 = vmatpush1.msra.mxu0 0.0
        %1535 = vmatprep.subr.mxu0 0.0
        %1536 = vmatpush1.msra.mxu0 0.0
        %1537 = vmatprep.subr.mxu0 0.0
        %1538 = vmatpush1.msra.mxu0 0.0
        %1539 = vmatprep.subr.mxu0 0.0
        %1540 = vmatpush1.msra.mxu0 0.0
        %1541 = vmatprep.subr.mxu0 0.0
        %1542 = vmatpush1.msra.mxu0 0.0
        %1543 = vmatprep.subr.mxu0 0.0
        %1544 = vmatpush1.msra.mxu0 0.0
        %1545 = vmatprep.subr.mxu0 0.0
        %1546 = vmatpush1.msra.mxu0 0.0
        %1547 = vmatprep.mubr.f32.mxu0 0.0
        %v1548 = vand.u32 %v889, 4294901760
        %1549 = vmatmul.mubr.f32.gmra.mrb[0].mxu0 %v1548
        %v1550 = vpop.f32.mrb[0].mxu0
        %v1551 = vadd.f32 %v1410, %v1550
        %v1552 = vpop.f32.mrb[0].mxu0
        %v1553 = vadd.f32 %v1412, %v1552
        %1554 = vmatprep.mubr.f32.mxu0 0.0
        %v1555 = vand.u32 %v892, 4294901760
        %1556 = vmatmul.mubr.f32.gmra.mrb[0].mxu0 %v1555
        %v1557 = vpop.f32.mrb[0].mxu0
        %v1558 = vadd.f32 %v1419, %v1557
        %v1559 = vpop.f32.mrb[0].mxu0
        %v1560 = vadd.f32 %v1421, %v1559
        %1561 = vmatprep.mubr.f32.mxu0 0.0
        %v1562 = vand.u32 %v895, 4294901760
        %1563 = vmatmul.mubr.f32.gmra.mrb[0].mxu0 %v1562
        %v1564 = vpop.f32.mrb[0].mxu0
        %v1565 = vadd.f32 %v1428, %v1564
        %v1566 = vpop.f32.mrb[0].mxu0
        %v1567 = vadd.f32 %v1430, %v1566
        %1568 = vmatprep.mubr.f32.mxu0 0.0
        %v1569 = vand.u32 %v898, 4294901760
        %1570 = vmatmul.mubr.f32.gmra.mrb[0].mxu0 %v1569
        %v1571 = vpop.f32.mrb[0].mxu0
        %v1572 = vadd.f32 %v1437, %v1571
        %v1573 = vpop.f32.mrb[0].mxu0
        %v1574 = vadd.f32 %v1439, %v1573
        %1575 = vmatprep.mubr.f32.mxu0 0.0
        %v1576 = vand.u32 %v901, 4294901760
        %1577 = vmatmul.mubr.f32.gmra.mrb[0].mxu0 %v1576
        %v1578 = vpop.f32.mrb[0].mxu0
        %v1579 = vadd.f32 %v1446, %v1578
        %v1580 = vpop.f32.mrb[0].mxu0
        %v1581 = vadd.f32 %v1448, %v1580
        %1582 = vmatprep.mubr.f32.mxu0 0.0
        %v1583 = vand.u32 %v904, 4294901760
        %1584 = vmatmul.mubr.f32.gmra.mrb[0].mxu0 %v1583
        %v1585 = vpop.f32.mrb[0].mxu0
        %v1586 = vadd.f32 %v1455, %v1585
        %v1587 = vpop.f32.mrb[0].mxu0
        %v1588 = vadd.f32 %v1457, %v1587
        %1589 = vmatprep.mubr.f32.mxu0 0.0
        %v1590 = vand.u32 %v907, 4294901760
        %1591 = vmatmul.mubr.f32.gmra.mrb[0].mxu0 %v1590
        %v1592 = vpop.f32.mrb[0].mxu0
        %v1593 = vadd.f32 %v1464, %v1592
        %v1594 = vpop.f32.mrb[0].mxu0
        %v1595 = vadd.f32 %v1466, %v1594
        %1596 = vmatprep.mubr.f32.mxu0 0.0
        %v1597 = vand.u32 %v910, 4294901760
        %1598 = vmatmul.mubr.f32.gmra.mrb[0].mxu0 %v1597
        %v1599 = vpop.f32.mrb[0].mxu0
        %v1600 = vadd.f32 %v1473, %v1599
        %v1601 = vpop.f32.mrb[0].mxu0
        %v1602 = vadd.f32 %v1475, %v1601
        %1603 = vdwg.mxu0
        %v1604 = vand.u32 %v917, 4294901760
        %1605 = vmatprep.subr.mxu0 %v1604
        %v1606 = vand.u32 %v914, 4294901760
        %1607 = vmatpush1.msra.mxu0 %v1606
        %1608 = vmatprep.subr.mxu0 0.0
        %1609 = vmatpush1.msra.mxu0 0.0
        %1610 = vmatprep.subr.mxu0 0.0
        %1611 = vmatpush1.msra.mxu0 0.0
        %1612 = vmatprep.subr.mxu0 0.0
        %1613 = vmatpush1.msra.mxu0 0.0
        %1614 = vmatprep.subr.mxu0 0.0
        %1615 = vmatpush1.msra.mxu0 0.0
        %1616 = vmatprep.subr.mxu0 0.0
        %1617 = vmatpush1.msra.mxu0 0.0
        %1618 = vmatprep.subr.mxu0 0.0
        %1619 = vmatpush1.msra.mxu0 0.0
        %1620 = vmatprep.subr.mxu0 0.0
        %1621 = vmatpush1.msra.mxu0 0.0
        %1622 = vmatprep.subr.mxu0 0.0
        %1623 = vmatpush1.msra.mxu0 0.0
        %1624 = vmatprep.subr.mxu0 0.0
        %1625 = vmatpush1.msra.mxu0 0.0
        %1626 = vmatprep.subr.mxu0 0.0
        %1627 = vmatpush1.msra.mxu0 0.0
        %1628 = vmatprep.subr.mxu0 0.0
        %1629 = vmatpush1.msra.mxu0 0.0
        %1630 = vmatprep.subr.mxu0 0.0
        %1631 = vmatpush1.msra.mxu0 0.0
        %1632 = vmatprep.subr.mxu0 0.0
        %1633 = vmatpush1.msra.mxu0 0.0
        %1634 = vmatprep.subr.mxu0 0.0
        %1635 = vmatpush1.msra.mxu0 0.0
        %1636 = vmatprep.subr.mxu0 0.0
        %1637 = vmatpush1.msra.mxu0 0.0
        %1638 = vmatprep.subr.mxu0 0.0
        %1639 = vmatpush1.msra.mxu0 0.0
        %1640 = vmatprep.subr.mxu0 0.0
        %1641 = vmatpush1.msra.mxu0 0.0
        %1642 = vmatprep.subr.mxu0 0.0
        %1643 = vmatpush1.msra.mxu0 0.0
        %1644 = vmatprep.subr.mxu0 0.0
        %1645 = vmatpush1.msra.mxu0 0.0
        %1646 = vmatprep.subr.mxu0 0.0
        %1647 = vmatpush1.msra.mxu0 0.0
        %1648 = vmatprep.subr.mxu0 0.0
        %1649 = vmatpush1.msra.mxu0 0.0
        %1650 = vmatprep.subr.mxu0 0.0
        %1651 = vmatpush1.msra.mxu0 0.0
        %1652 = vmatprep.subr.mxu0 0.0
        %1653 = vmatpush1.msra.mxu0 0.0
        %1654 = vmatprep.subr.mxu0 0.0
        %1655 = vmatpush1.msra.mxu0 0.0
        %1656 = vmatprep.subr.mxu0 0.0
        %1657 = vmatpush1.msra.mxu0 0.0
        %1658 = vmatprep.subr.mxu0 0.0
        %1659 = vmatpush1.msra.mxu0 0.0
        %1660 = vmatprep.subr.mxu0 0.0
        %1661 = vmatpush1.msra.mxu0 0.0
        %1662 = vmatprep.subr.mxu0 0.0
        %1663 = vmatpush1.msra.mxu0 0.0
        %1664 = vmatprep.subr.mxu0 0.0
        %1665 = vmatpush1.msra.mxu0 0.0
        %1666 = vmatprep.subr.mxu0 0.0
        %1667 = vmatpush1.msra.mxu0 0.0
        %1668 = vmatprep.subr.mxu0 0.0
        %1669 = vmatpush1.msra.mxu0 0.0
        %1670 = vmatprep.mubr.f32.mxu0 0.0
        %v1671 = vand.u32 %v889, 4294901760
        %1672 = vmatmul.mubr.f32.gmra.mrb[0].mxu0 %v1671
        %v1673 = vpop.f32.mrb[0].mxu0
        %v1674 = vadd.f32 %v1551, %v1673
        %v1675 = vpop.f32.mrb[0].mxu0
        %v1676 = vadd.f32 %v1553, %v1675
        %1677 = vmatprep.mubr.f32.mxu0 0.0
        %v1678 = vand.u32 %v892, 4294901760
        %1679 = vmatmul.mubr.f32.gmra.mrb[0].mxu0 %v1678
        %v1680 = vpop.f32.mrb[0].mxu0
        %v1681 = vadd.f32 %v1558, %v1680
        %v1682 = vpop.f32.mrb[0].mxu0
        %v1683 = vadd.f32 %v1560, %v1682
        %1684 = vmatprep.mubr.f32.mxu0 0.0
        %v1685 = vand.u32 %v895, 4294901760
        %1686 = vmatmul.mubr.f32.gmra.mrb[0].mxu0 %v1685
        %v1687 = vpop.f32.mrb[0].mxu0
        %v1688 = vadd.f32 %v1565, %v1687
        %v1689 = vpop.f32.mrb[0].mxu0
        %v1690 = vadd.f32 %v1567, %v1689
        %1691 = vmatprep.mubr.f32.mxu0 0.0
        %v1692 = vand.u32 %v898, 4294901760
        %1693 = vmatmul.mubr.f32.gmra.mrb[0].mxu0 %v1692
        %v1694 = vpop.f32.mrb[0].mxu0
        %v1695 = vadd.f32 %v1572, %v1694
        %v1696 = vpop.f32.mrb[0].mxu0
        %v1697 = vadd.f32 %v1574, %v1696
        %1698 = vmatprep.mubr.f32.mxu0 0.0
        %v1699 = vand.u32 %v901, 4294901760
        %1700 = vmatmul.mubr.f32.gmra.mrb[0].mxu0 %v1699
        %v1701 = vpop.f32.mrb[0].mxu0
        %v1702 = vadd.f32 %v1579, %v1701
        %v1703 = vpop.f32.mrb[0].mxu0
        %v1704 = vadd.f32 %v1581, %v1703
        %1705 = vmatprep.mubr.f32.mxu0 0.0
        %v1706 = vand.u32 %v904, 4294901760
        %1707 = vmatmul.mubr.f32.gmra.mrb[0].mxu0 %v1706
        %v1708 = vpop.f32.mrb[0].mxu0
        %v1709 = vadd.f32 %v1586, %v1708
        %v1710 = vpop.f32.mrb[0].mxu0
        %v1711 = vadd.f32 %v1588, %v1710
        %1712 = vmatprep.mubr.f32.mxu0 0.0
        %v1713 = vand.u32 %v907, 4294901760
        %1714 = vmatmul.mubr.f32.gmra.mrb[0].mxu0 %v1713
        %v1715 = vpop.f32.mrb[0].mxu0
        %v1716 = vadd.f32 %v1593, %v1715
        %v1717 = vpop.f32.mrb[0].mxu0
        %v1718 = vadd.f32 %v1595, %v1717
        %1719 = vmatprep.mubr.f32.mxu0 0.0
        %v1720 = vand.u32 %v910, 4294901760
        %1721 = vmatmul.mubr.f32.gmra.mrb[0].mxu0 %v1720
        %v1722 = vpop.f32.mrb[0].mxu0
        %v1723 = vadd.f32 %v1600, %v1722
        %v1724 = vpop.f32.mrb[0].mxu0
        %v1725 = vadd.f32 %v1602, %v1724
        %1726 = vdwg.mxu0
        %v1727 = vmul.f32 %v1674, 0.5
        %v1728 = vmul.f32 %v1676, 0.5
        %v1729 = vmul.f32 %v1681, 0.5
        %v1730 = vmul.f32 %v1683, 0.5
        %v1731 = vmul.f32 %v1688, 0.5
        %v1732 = vmul.f32 %v1690, 0.5
        %v1733 = vmul.f32 %v1695, 0.5
        %v1734 = vmul.f32 %v1697, 0.5
        %v1735 = vmul.f32 %v1702, 0.5
        %v1736 = vmul.f32 %v1704, 0.5
        %v1737 = vmul.f32 %v1709, 0.5
        %v1738 = vmul.f32 %v1711, 0.5
        %v1739 = vmul.f32 %v1716, 0.5
        %v1740 = vmul.f32 %v1718, 0.5
        %v1741 = vmul.f32 %v1723, 0.5
        %v1742 = vmul.f32 %v1725, 0.5
        %v1743 = vtanh.pop %v1727
        %v1744 = vtanh.pop %v1728
        %v1745 = vtanh.pop %v1729
        %v1746 = vtanh.pop %v1730
        %v1747 = vtanh.pop %v1731
        %v1748 = vtanh.pop %v1732
        %v1749 = vtanh.pop %v1733
        %v1750 = vtanh.pop %v1734
        %v1751 = vtanh.pop %v1735
        %v1752 = vtanh.pop %v1736
        %v1753 = vtanh.pop %v1737
        %v1754 = vtanh.pop %v1738
        %v1755 = vtanh.pop %v1739
        %v1756 = vtanh.pop %v1740
        %v1757 = vtanh.pop %v1741
        %v1758 = vtanh.pop %v1742
        %v1759 = vmul.f32 %v1743, 0.5
        %v1760 = vmul.f32 %v1744, 0.5
        %v1761 = vmul.f32 %v1745, 0.5
        %v1762 = vmul.f32 %v1746, 0.5
        %v1763 = vmul.f32 %v1747, 0.5
        %v1764 = vmul.f32 %v1748, 0.5
        %v1765 = vmul.f32 %v1749, 0.5
        %v1766 = vmul.f32 %v1750, 0.5
        %v1767 = vmul.f32 %v1751, 0.5
        %v1768 = vmul.f32 %v1752, 0.5
        %v1769 = vmul.f32 %v1753, 0.5
        %v1770 = vmul.f32 %v1754, 0.5
        %v1771 = vmul.f32 %v1755, 0.5
        %v1772 = vmul.f32 %v1756, 0.5
        %v1773 = vmul.f32 %v1757, 0.5
        %v1774 = vmul.f32 %v1758, 0.5
        %v1775 = vadd.f32 %v1759, 0.5
        %v1776 = vadd.f32 %v1760, 0.5
        %v1777 = vadd.f32 %v1761, 0.5
        %v1778 = vadd.f32 %v1762, 0.5
        %v1779 = vadd.f32 %v1763, 0.5
        %v1780 = vadd.f32 %v1764, 0.5
        %v1781 = vadd.f32 %v1765, 0.5
        %v1782 = vadd.f32 %v1766, 0.5
        %v1783 = vadd.f32 %v1767, 0.5
        %v1784 = vadd.f32 %v1768, 0.5
        %v1785 = vadd.f32 %v1769, 0.5
        %v1786 = vadd.f32 %v1770, 0.5
        %v1787 = vadd.f32 %v1771, 0.5
        %v1788 = vadd.f32 %v1772, 0.5
        %v1789 = vadd.f32 %v1773, 0.5
        %v1790 = vadd.f32 %v1774, 0.5
        %1791 = vst [vmem:[%s206] sm:$0xff] %v1775
        %1792 = vst [vmem:[%s206 + $0x8] sm:$0xff] %v1776
        %1793 = vst [vmem:[%s206 + $0x10] sm:$0xff] %v1777
        %1794 = vst [vmem:[%s206 + $0x18] sm:$0xff] %v1778
        %1795 = vst [vmem:[%s206 + $0x20] sm:$0xff] %v1779
        %1796 = vst [vmem:[%s206 + $0x28] sm:$0xff] %v1780
        %1797 = vst [vmem:[%s206 + $0x30] sm:$0xff] %v1781
        %1798 = vst [vmem:[%s206 + $0x38] sm:$0xff] %v1782
        %1799 = vst [vmem:[%s206 + $0x40] sm:$0xff] %v1783
        %1800 = vst [vmem:[%s206 + $0x48] sm:$0xff] %v1784
        %1801 = vst [vmem:[%s206 + $0x50] sm:$0xff] %v1785
        %1802 = vst [vmem:[%s206 + $0x58] sm:$0xff] %v1786
        %1803 = vst [vmem:[%s206 + $0x60] sm:$0xff] %v1787
        %1804 = vst [vmem:[%s206 + $0x68] sm:$0xff] %v1788
        %1805 = vst [vmem:[%s206 + $0x70] sm:$0xff] %v1789
        %1806 = vst [vmem:[%s206 + $0x78] sm:$0xff] %v1790
        %s1807 = sand.u32 %s112, 1
        %s1808 = scalar_lea.sflag [#allocation4], %s1807
        %s1809 = sand.u32 %s112, 1
        %s1810 = smul.addr %s1809, 128
        %s1811 = scalar_lea.vmem [#allocation5], %s1810
        // Predicated region
        $region37: #{tpu_custom_call.1} parent=31 // pred_check
          %p1812 = pneg %p122
        $region38: #{tpu_custom_call.1} parent=31 // pred_check_branch
          %1814 = sbr.rel (%p1812) target = $region40
        $region39: #{tpu_custom_call.1} parent=31 // pred_region
          %s1815 = smul.u32 2, %s25
          %s1817 = ssub.s32 2048, 2048
          %1818 = vsyncadd %s1808, %s1817
          %s1819 = smul.addr %s24, 16
          %s1820 = sadd.s32 %s1815, %s1819
          %s1821 = smul.addr %s1820, 128
          %s1822 = scalar_lea.hbm %s3, %s1821
          %s1823 = sshll.u32 %s1811, 4
          %s1824 = int_to_ptr.vmem [resolvable:$true] %s1823
          %1829 = dma.vmem_to_hbm [thread:$0]  %s1824, 2048, %s1822, %s1808, 256, 256, 16
        $region40: #{tpu_custom_call.1} parent=31 // pred_fallthru
          _
      $region32: #{tpu_custom_call.1} parent=5 // pred_fallthru
        _
      %p1830 = scmp.le.s32.totalorder 2, %s15
      // Predicated region
      $region41: #{tpu_custom_call.1} parent=5 // pred_check
        %p1831 = pneg %p1830
      $region42: #{tpu_custom_call.1} parent=5 // pred_check_branch
        %1833 = sbr.rel (%p1831) target = $region44
      $region43: #{tpu_custom_call.1} parent=5 // pred_region
        %s1834 = ssub.s32 %s15, 2
        // Predicated region
        $region45: #{tpu_custom_call.1} parent=43 // pred_check
          %p1835 = pneg %p128
        $region46: #{tpu_custom_call.1} parent=43 // pred_check_branch
          %1837 = sbr.rel (%p1835) target = $region48
        $region47: #{tpu_custom_call.1} parent=43 // pred_region
          %s1838 = sand.u32 %s113, 1
          %s1839 = scalar_lea.sflag [#allocation4], %s1838
          %s1840 = sand.u32 %s113, 1
          %s1841 = smul.addr %s1840, 128
          %s1842 = scalar_lea.vmem [#allocation5], %s1841
          %1843 = dma.done %s1839, 2048
        $region48: #{tpu_custom_call.1} parent=43 // pred_fallthru
          _
      $region44: #{tpu_custom_call.1} parent=5 // pred_fallthru
        _
    $region6: #{tpu_custom_call.1} parent=1 // loop_footer
      %s19 = sadd.s32 1, %s15
    $region7: #{tpu_custom_call.1} parent=1 // loop_footer_branch
      %14 = sbr.rel target = $region3
    $region8: #{tpu_custom_call.1} parent=1 // loop_exit
      _
    %1844 = vsyncpa [#allocation3], 1
    %s1845 = scalar_lea.sflag [#allocation3], 1
    %1846 = vsyncpa %s1845, 1
    %1847 = vsyncpa [#allocation4], 1
    %s1848 = scalar_lea.sflag [#allocation4], 1
    %1849 = vsyncpa %s1848, 1

</llo_original>
